<compile_context>
chip_gen: v6e
topology: v6e:2x2x1
jax: 0.10.0
libtpu: 0.0.40
codegen_flags: <defaults>
</compile_context>

<pallas_src>
import math

import jax
import jax.numpy as jnp
from jax.experimental import pallas as pl
from jax.experimental.pallas import tpu as pltpu

# ---------------- small synthetic config (VitsConfig fields used) ----------------
HIDDEN = 32        # config.hidden_size  (filter_channels)
EMBED = 16         # config.speaker_embedding_size
KSIZE = 3          # config.duration_predictor_kernel_size
DDS_LAYERS = 3     # config.depth_separable_num_layers
DS_CHANNELS = 2    # config.depth_separable_channels
NUM_BINS = 10      # config.duration_predictor_flow_bins
TAIL_BOUND = 5.0   # config.duration_predictor_tail_bound
NUM_FLOWS = 2      # config.duration_predictor_num_flows
B, T = 2, 8

LOG_2PI = math.log(2.0 * math.pi)


# ---------------- in-kernel math helpers ----------------
def _erf_approx(x):
    # Abramowitz & Stegun 7.1.26, max abs error ~1.5e-7.
    # TODO(synk): torch uses exact erf GELU; exact erf availability in Mosaic is
    # uncertain, so we keep this high-accuracy approximation.
    s = jnp.where(x >= 0.0, 1.0, -1.0)
    a = jnp.abs(x)
    t = 1.0 / (1.0 + 0.3275911 * a)
    poly = ((((1.061405429 * t - 1.453152027) * t + 1.421413741) * t
             - 0.284496736) * t + 0.254829592) * t
    return s * (1.0 - poly * jnp.exp(-a * a))


def _gelu(x):
    return 0.5 * x * (1.0 + _erf_approx(x * 0.7071067811865475))


def _layer_norm(h, gamma, beta, eps=1e-5):
    mu = jnp.mean(h, axis=-1, keepdims=True)
    var = jnp.mean(jnp.square(h - mu), axis=-1, keepdims=True)
    return (h - mu) * jax.lax.rsqrt(var + eps) * gamma + beta


def _softplus(v):
    return jnp.where(v > 20.0, v, jnp.log(1.0 + jnp.exp(jnp.minimum(v, 20.0))))


# ---------------- shared fused DDS stack (operates on VMEM-resident values) ----------------
def _dds_stack(h, m, row_idx, dw_ref, db_ref, l1g_ref, l1b_ref,
               pww_ref, pwb_ref, l2g_ref, l2b_ref, num_layers, ksize, seq_len):
    """Dilated depth-separable conv stack: h, m are (T, C)/(T, 1) values."""
    center = (ksize - 1) // 2
    for l in range(num_layers):                       # static unroll (L=3)
        dilation = ksize ** l
        dw = dw_ref[l]                                # (K, C)
        xm = h * m
        acc = xm * dw[center:center + 1, :]           # center tap (offset 0)
        for k in range(ksize):                        # static unroll (K=3)
            if k == center:
                continue
            off = (k - center) * dilation             # static per tap
            shift = (-off) % seq_len
            # shifted[t] = xm[t + off] (zero padding via edge mask); XLU roll.
            shifted = xm if shift == 0 else pltpu.roll(xm, shift, 0)
            valid = jnp.logical_and(row_idx + off >= 0, row_idx + off < seq_len)
            shifted = jnp.where(valid, shifted, 0.0)
            acc = acc + shifted * dw[k:k + 1, :]
        h1 = acc + db_ref[l]                          # depthwise conv bias
        h1 = _gelu(_layer_norm(h1, l1g_ref[l], l1b_ref[l]))
        h2 = jnp.dot(h1, pww_ref[l], preferred_element_type=jnp.float32) + pwb_ref[l]
        h2 = _gelu(_layer_norm(h2, l2g_ref[l], l2b_ref[l]))
        h = h + h2                                    # residual (dropout = identity, eval)
    return h * m


# ---------------- kernel: fused trunk (pre conv + cond bias + DDS + proj conv) ----------------
def make_trunk_kernel(cin, seq_len, num_layers, ksize):
    def kernel(x_ref, gb_ref, m_ref, prew_ref, preb_ref,
               dw_ref, db_ref, l1g_ref, l1b_ref, pww_ref, pwb_ref, l2g_ref, l2b_ref,
               projw_ref, projb_ref, o_ref):
        x = x_ref[0]                                  # (T, cin)
        gb = gb_ref[0]                                # (1, HIDDEN)  per-batch cond bias
        m = m_ref[0]                                  # (T, 1)
        prew = prew_ref[...]
        if cin == 1:
            h = x * prew + preb_ref[...]              # degenerate Cin==1 pointwise conv
        else:
            h = jnp.dot(x, prew, preferred_element_type=jnp.float32) + preb_ref[...]
        h = h + gb

        row_idx = jax.lax.broadcasted_iota(jnp.int32, (seq_len, 1), 0)
        h = _dds_stack(h, m, row_idx, dw_ref, db_ref, l1g_ref, l1b_ref,
                       pww_ref, pwb_ref, l2g_ref, l2b_ref, num_layers, ksize, seq_len)

        out = jnp.dot(h, projw_ref[...], preferred_element_type=jnp.float32) + projb_ref[...]
        o_ref[0] = out * m
    return kernel


def _full_spec(a):
    nd = a.ndim
    return pl.BlockSpec(a.shape, lambda b, _nd=nd: (0,) * _nd)


def run_trunk(x, gbias, mask, pre, dds, proj):
    bx, tx, cin = x.shape
    cout = proj['w'].shape[1]
    kern = make_trunk_kernel(cin, tx, DDS_LAYERS, KSIZE)
    args = (x.astype(jnp.float32), gbias.astype(jnp.float32), mask.astype(jnp.float32),
            pre['w'], pre['b'],
            dds['dw'], dds['db'], dds['ln1_g'], dds['ln1_b'],
            dds['pw_w'], dds['pw_b'], dds['ln2_g'], dds['ln2_b'],
            proj['w'], proj['b'])
    data_specs = [
        pl.BlockSpec((1, tx, cin), lambda b: (b, 0, 0)),
        pl.BlockSpec((1, 1, HIDDEN), lambda b: (b, 0, 0)),
        pl.BlockSpec((1, tx, 1), lambda b: (b, 0, 0)),
    ]
    param_specs = [_full_spec(a) for a in args[3:]]
    return pl.pallas_call(
        kern,
        grid=(bx,),
        in_specs=data_specs + param_specs,
        out_specs=pl.BlockSpec((1, tx, cout), lambda b: (b, 0, 0)),
        out_shape=jax.ShapeDtypeStruct((bx, tx, cout), jnp.float32),
        compiler_params=pltpu.CompilerParams(dimension_semantics=("parallel",)),
    )(*args)


# ---------------- kernel: fused conv flow (pre conv + DDS + proj + RQ spline) ----------------
def make_conv_flow_kernel(seq_len, num_layers, ksize, num_bins, reverse, tail_bound,
                          min_bin_width=1e-3, min_bin_height=1e-3, min_derivative=1e-3):
    nb = num_bins
    lb, ub = -tail_bound, tail_bound

    def kernel(first_ref, second_ref, g_ref, m_ref,
               prew_ref, preb_ref,
               dw_ref, db_ref, l1g_ref, l1b_ref, pww_ref, pwb_ref, l2g_ref, l2b_ref,
               wjw_ref, wjb_ref, hjw_ref, hjb_ref, djw_ref, djb_ref,
               out_ref, lad_ref):
        first = first_ref[0]                          # (T, 1)
        x = second_ref[0]                             # (T, 1)
        g = g_ref[0]                                  # (T, HIDDEN) conditioning
        m = m_ref[0]                                  # (T, 1)

        # pre 1x1 conv (half_channels == 1) + conditioning
        h = first * prew_ref[...] + preb_ref[...]     # (T, HIDDEN)
        h = h + g

        row_idx = jax.lax.broadcasted_iota(jnp.int32, (seq_len, 1), 0)
        h = _dds_stack(h, m, row_idx, dw_ref, db_ref, l1g_ref, l1b_ref,
                       pww_ref, pwb_ref, l2g_ref, l2b_ref, num_layers, ksize, seq_len)

        # projection conv, split into width / height / derivative heads
        # (the 1/sqrt(filter_channels) scale is folded into the w/h weights).
        uw = (jnp.dot(h, wjw_ref[...], preferred_element_type=jnp.float32) + wjb_ref[...]) * m
        uh = (jnp.dot(h, hjw_ref[...], preferred_element_type=jnp.float32) + hjb_ref[...]) * m
        ud = (jnp.dot(h, djw_ref[...], preferred_element_type=jnp.float32) + djb_ref[...]) * m

        inside = jnp.logical_and(x >= lb, x <= ub)
        xin = jnp.clip(x, lb, ub)

        ii = jax.lax.broadcasted_iota(jnp.int32, (nb, nb), 0)
        jj = jax.lax.broadcasted_iota(jnp.int32, (nb, nb), 1)
        tri_incl = (ii <= jj).astype(jnp.float32)     # inclusive cumsum
        tri_excl = (ii < jj).astype(jnp.float32)      # exclusive cumsum
        col = jax.lax.broadcasted_iota(jnp.int32, (seq_len, nb), 1)

        def bins(u, minb):
            u = u - jnp.max(u, axis=-1, keepdims=True)
            e = jnp.exp(u)
            w = e * pl.reciprocal(jnp.sum(e, axis=-1, keepdims=True), approx=True)
            w = minb + (1.0 - minb * nb) * w
            right = (ub - lb) * jnp.dot(w, tri_incl, preferred_element_type=jnp.float32) + lb
            right = jnp.where(col == nb - 1, ub, right)   # force last edge == ub
            left = (ub - lb) * jnp.dot(w, tri_excl, preferred_element_type=jnp.float32) + lb
            return left, right                             # left / right bin edges

        cw_l, cw_r = bins(uw, min_bin_width)
        ch_l, ch_r = bins(uh, min_bin_height)
        widths = cw_r - cw_l
        heights = ch_r - ch_l

        loc = ch_r if reverse else cw_r
        loc = jnp.where(col == nb - 1, loc + 1e-6, loc)
        bin_idx = jnp.sum((xin >= loc).astype(jnp.int32), axis=-1, keepdims=True)
        bin_idx = jnp.clip(bin_idx, 0, nb - 1)
        onehot = (col == bin_idx).astype(jnp.float32)

        def gather(a):
            return jnp.sum(a * onehot, axis=-1, keepdims=True)

        in_cw = gather(cw_l)
        in_w = gather(widths)
        in_ch = gather(ch_l)
        in_h = gather(heights)
        in_delta = in_h / in_w

        # Derivatives: reference pads unnormalized derivatives with a constant
        # chosen so min_derivative + softplus(const) == 1.0 at both ends.
        colD = jax.lax.broadcasted_iota(jnp.int32, (seq_len, nb - 1), 1)
        ud_prev = jnp.sum(ud * (colD == bin_idx - 1).astype(jnp.float32), axis=-1, keepdims=True)
        ud_curr = jnp.sum(ud * (colD == bin_idx).astype(jnp.float32), axis=-1, keepdims=True)
        in_d = jnp.where(bin_idx == 0, 1.0, min_derivative + _softplus(ud_prev))
        in_dp1 = jnp.where(bin_idx == nb - 1, 1.0, min_derivative + _softplus(ud_curr))

        inter1 = in_d + in_dp1 - 2.0 * in_delta

        if not reverse:
            theta = (xin - in_cw) / in_w
            tomt = theta * (1.0 - theta)
            numer = in_h * (in_delta * jnp.square(theta) + in_d * tomt)
            denom = in_delta + inter1 * tomt
            y = in_ch + numer / denom
            dnum = jnp.square(in_delta) * (in_dp1 * jnp.square(theta)
                                           + 2.0 * in_delta * tomt
                                           + in_d * jnp.square(1.0 - theta))
            lad = jnp.log(jnp.maximum(dnum / (denom * denom), 1e-37))
        else:
            i2 = xin - in_ch
            i3 = i2 * inter1
            a = in_h * (in_delta - in_d) + i3
            b_ = in_h * in_d - i3
            c = -in_delta * i2
            disc = jnp.maximum(jnp.square(b_) - 4.0 * a * c, 0.0)
            root = 2.0 * c / (-b_ - jnp.sqrt(disc))
            y = root * in_w + in_cw
            tomt = root * (1.0 - root)
            denom = in_delta + inter1 * tomt
            dnum = jnp.square(in_delta) * (in_dp1 * jnp.square(root)
                                           + 2.0 * in_delta * tomt
                                           + in_d * jnp.square(1.0 - root))
            lad = -jnp.log(jnp.maximum(dnum / (denom * denom), 1e-37))

        y_out = jnp.where(inside, y, x)               # identity outside tails
        lad_out = jnp.where(inside, lad, 0.0)

        col2 = jax.lax.broadcasted_iota(jnp.int32, (seq_len, 2), 1)
        out_ref[0] = jnp.where(col2 == 0, first, y_out) * m
        lad_ref[0] = lad_out
    return kernel


def conv_flow_apply(p, x, mask, g, reverse):
    bx, tx, c2 = x.shape
    half = c2 // 2
    assert half == 1, "depth_separable_channels // 2 must be 1 for this kernel"
    nb = NUM_BINS
    scale = 1.0 / math.sqrt(HIDDEN)
    pw, pb = p['proj']['w'], p['proj']['b']
    ww, wh, wd = pw[:, :nb] * scale, pw[:, nb:2 * nb] * scale, pw[:, 2 * nb:]
    bw, bh, bd = pb[:, :nb] * scale, pb[:, nb:2 * nb] * scale, pb[:, 2 * nb:]

    first = x[..., :half]
    second = x[..., half:]
    if g is None:
        g = jnp.zeros((bx, tx, HIDDEN), jnp.float32)
    dds = p['dds']

    kern = make_conv_flow_kernel(tx, DDS_LAYERS, KSIZE, nb, reverse, TAIL_BOUND)
    args = (first.astype(jnp.float32), second.astype(jnp.float32),
            g.astype(jnp.float32), mask.astype(jnp.float32),
            p['pre']['w'], p['pre']['b'],
            dds['dw'], dds['db'], dds['ln1_g'], dds['ln1_b'],
            dds['pw_w'], dds['pw_b'], dds['ln2_g'], dds['ln2_b'],
            ww, bw, wh, bh, wd, bd)
    data_specs = [
        pl.BlockSpec((1, tx, half), lambda b: (b, 0, 0)),
        pl.BlockSpec((1, tx, half), lambda b: (b, 0, 0)),
        pl.BlockSpec((1, tx, HIDDEN), lambda b: (b, 0, 0)),
        pl.BlockSpec((1, tx, 1), lambda b: (b, 0, 0)),
    ]
    param_specs = [_full_spec(a) for a in args[4:]]
    outputs, lad = pl.pallas_call(
        kern,
        grid=(bx,),
        in_specs=data_specs + param_specs,
        out_specs=[pl.BlockSpec((1, tx, 2 * half), lambda b: (b, 0, 0)),
                   pl.BlockSpec((1, tx, half), lambda b: (b, 0, 0))],
        out_shape=(jax.ShapeDtypeStruct((bx, tx, 2 * half), jnp.float32),
                   jax.ShapeDtypeStruct((bx, tx, half), jnp.float32)),
        compiler_params=pltpu.CompilerParams(dimension_semantics=("parallel",)),
    )(*args)
    if not reverse:
        return outputs, jnp.sum(lad * mask, axis=(1, 2))
    return outputs, None


# ---------------- elementwise affine flow + flow dispatch (plain XLA glue) ----------------
def elementwise_affine(p, x, mask, reverse):
    t = p['translate']
    ls = p['log_scale']
    if not reverse:
        out = (t + jnp.exp(ls) * x) * mask
        logdet = jnp.sum(jnp.broadcast_to(ls, x.shape) * mask, axis=(1, 2))
        return out, logdet
    return (x - t) * jnp.exp(-ls) * mask, None


def flow_apply(p, x, mask, g, reverse):
    if p['type'] == 'affine':
        return elementwise_affine(p, x, mask, reverse)
    return conv_flow_apply(p, x, mask, g, reverse)


# ---------------- the full module forward ----------------
def stochastic_duration_predictor(params, inputs, padding_mask,
                                  global_conditioning=None, durations=None,
                                  reverse=False, noise_scale=1.0, rng=None):
    # inputs: (B, hidden, T)  padding_mask: (B, 1, T)  durations: (B, 1, T)
    # global_conditioning: (B, embed, 1)
    x_in = jnp.transpose(inputs, (0, 2, 1)).astype(jnp.float32)            # (B, T, F)
    mask = jnp.transpose(padding_mask, (0, 2, 1)).astype(jnp.float32)      # (B, T, 1)
    bx, tx, _ = x_in.shape

    if global_conditioning is not None:
        g_cl = jnp.transpose(global_conditioning, (0, 2, 1)).astype(jnp.float32)   # (B, 1, E)
        gbias = jnp.einsum('bte,eh->bth', g_cl, params['cond']['w']) + params['cond']['b']
    else:
        gbias = jnp.zeros((bx, 1, HIDDEN), jnp.float32)
    zero_bias = jnp.zeros((bx, 1, HIDDEN), jnp.float32)

    # main trunk: conv_pre + cond + conv_dds + conv_proj (one fused kernel)
    x = run_trunk(x_in, gbias, mask, params['conv_pre'], params['conv_dds'], params['conv_proj'])

    if not reverse:
        d = jnp.transpose(durations, (0, 2, 1)).astype(jnp.float32)        # (B, T, 1)
        h = run_trunk(d, zero_bias, mask, params['post_conv_pre'],
                      params['post_conv_dds'], params['post_conv_proj'])

        random_posterior = jax.random.normal(rng, (bx, tx, DS_CHANNELS), jnp.float32) * mask
        latents_post = random_posterior
        g_post = x + h
        latents_post, log_det = flow_apply(params['post_flows'][0], latents_post, mask, g_post, False)
        log_det_post_sum = log_det
        for fp in params['post_flows'][1:]:
            latents_post, log_det = flow_apply(fp, latents_post, mask, g_post, False)
            latents_post = jnp.flip(latents_post, axis=-1)                 # flip channel dim
            log_det_post_sum = log_det_post_sum + log_det
        first = latents_post[..., :1]
        second = latents_post[..., 1:]
        log_det_post_sum = log_det_post_sum + jnp.sum(
            (jax.nn.log_sigmoid(first) + jax.nn.log_sigmoid(-first)) * mask, axis=(1, 2))
        logq = jnp.sum(-0.5 * (LOG_2PI + jnp.square(random_posterior)) * mask,
                       axis=(1, 2)) - log_det_post_sum

        first = (d - jax.nn.sigmoid(first)) * mask
        first = jnp.log(jnp.maximum(first, 1e-5)) * mask
        log_det_sum = jnp.sum(-first, axis=(1, 2))
        latents = jnp.concatenate([first, second], axis=-1)
        latents, log_det = flow_apply(params['flows'][0], latents, mask, x, False)
        log_det_sum = log_det_sum + log_det
        for fp in params['flows'][1:]:
            latents, log_det = flow_apply(fp, latents, mask, x, False)
            latents = jnp.flip(latents, axis=-1)
            log_det_sum = log_det_sum + log_det
        nll = jnp.sum(0.5 * (LOG_2PI + jnp.square(latents)) * mask, axis=(1, 2)) - log_det_sum
        return nll + logq
    else:
        flows = list(reversed(params['flows']))
        flows = flows[:-2] + [flows[-1]]                                    # drop one, keep affine
        latents = jax.random.normal(rng, (bx, tx, DS_CHANNELS), jnp.float32) * noise_scale
        for fp in flows:
            latents = jnp.flip(latents, axis=-1)
            latents, _ = flow_apply(fp, latents, mask, x, True)
        log_duration = latents[..., :DS_CHANNELS // 2]                      # (B, T, 1)
        return jnp.transpose(log_duration, (0, 2, 1))                       # (B, 1, T)


# ---------------- deterministic parameter init ----------------
def init_pw(key, cin, cout, scale=1.0):
    kw, kb = jax.random.split(key)
    w = jax.random.normal(kw, (cin, cout), jnp.float32) * (scale / math.sqrt(max(cin, 1)))
    b = jax.random.normal(kb, (1, cout), jnp.float32) * 0.01
    return {'w': w, 'b': b}


def init_dds(key, channels, ksize, num_layers):
    ks = jax.random.split(key, 8)
    return {
        'dw': jax.random.normal(ks[0], (num_layers, ksize, channels), jnp.float32) * 0.3,
        'db': jax.random.normal(ks[1], (num_layers, 1, channels), jnp.float32) * 0.01,
        'ln1_g': 1.0 + 0.05 * jax.random.normal(ks[2], (num_layers, 1, channels), jnp.float32),
        'ln1_b': 0.05 * jax.random.normal(ks[3], (num_layers, 1, channels), jnp.float32),
        'pw_w': jax.random.normal(ks[4], (num_layers, channels, channels), jnp.float32)
                / math.sqrt(channels),
        'pw_b': jax.random.normal(ks[5], (num_layers, 1, channels), jnp.float32) * 0.01,
        'ln2_g': 1.0 + 0.05 * jax.random.normal(ks[6], (num_layers, 1, channels), jnp.float32),
        'ln2_b': 0.05 * jax.random.normal(ks[7], (num_layers, 1, channels), jnp.float32),
    }


def init_affine():
    # torch inits these parameters to zeros
    return {'type': 'affine',
            'translate': jnp.zeros((1, 1, DS_CHANNELS), jnp.float32),
            'log_scale': jnp.zeros((1, 1, DS_CHANNELS), jnp.float32)}


def init_conv_flow(key):
    k1, k2, k3 = jax.random.split(key, 3)
    half = DS_CHANNELS // 2
    return {'type': 'conv_flow',
            'pre': init_pw(k1, half, HIDDEN),
            'dds': init_dds(k2, HIDDEN, KSIZE, DDS_LAYERS),
            'proj': init_pw(k3, HIDDEN, half * (NUM_BINS * 3 - 1), scale=0.3)}


def init_params(key):
    keys = jax.random.split(key, 9)
    return {
        'conv_pre': init_pw(keys[0], HIDDEN, HIDDEN),
        'conv_proj': init_pw(keys[1], HIDDEN, HIDDEN),
        'conv_dds': init_dds(keys[2], HIDDEN, KSIZE, DDS_LAYERS),
        'cond': init_pw(keys[3], EMBED, HIDDEN),
        'post_conv_pre': init_pw(keys[4], 1, HIDDEN),
        'post_conv_proj': init_pw(keys[5], HIDDEN, HIDDEN),
        'post_conv_dds': init_dds(keys[6], HIDDEN, KSIZE, DDS_LAYERS),
        'flows': [init_affine()] + [init_conv_flow(k) for k in jax.random.split(keys[7], NUM_FLOWS)],
        'post_flows': [init_affine()] + [init_conv_flow(k) for k in jax.random.split(keys[8], NUM_FLOWS)],
    }


# ---------------- main ----------------
if __name__ == "__main__":
    key = jax.random.PRNGKey(0)
    k_param, k_in, k_dur, k_g, k_post, k_rev = jax.random.split(key, 6)
    params = init_params(k_param)

    inputs = 0.5 * jax.random.normal(k_in, (B, HIDDEN, T), jnp.float32)
    padding_mask = jnp.ones((B, 1, T), jnp.float32).at[1, :, T - 2:].set(0.0)
    durations = jnp.abs(jax.random.normal(k_dur, (B, 1, T), jnp.float32)) + 0.5
    global_cond = 0.5 * jax.random.normal(k_g, (B, EMBED, 1), jnp.float32)

    # training branch (reverse=False): returns nll + logq, shape (B,)
    nll_plus_logq = stochastic_duration_predictor(
        params, inputs, padding_mask, global_conditioning=global_cond,
        durations=durations, reverse=False, rng=k_post)
    nll_plus_logq = jax.block_until_ready(nll_plus_logq)
    assert nll_plus_logq.shape == (B,)
    assert bool(jnp.all(jnp.isfinite(nll_plus_logq)))

    # inference branch (reverse=True): returns log durations, shape (B, 1, T)
    log_duration = stochastic_duration_predictor(
        params, inputs, padding_mask, global_conditioning=global_cond,
        reverse=True, noise_scale=1.0, rng=k_rev)
    log_duration = jax.block_until_ready(log_duration)
    assert log_duration.shape == (B, 1, T)
    assert bool(jnp.all(jnp.isfinite(log_duration)))

    print("KERNEL_OK")
</pallas_src>

<mosaic_0001>
module attributes {stable_mosaic.version = 11 : i64} {
  func.func @kernel(%arg0: i32, %arg1: memref<1x8x32xf32, #tpu.memory_space<vmem>>, %arg2: memref<1x1x32xf32, #tpu.memory_space<vmem>>, %arg3: memref<1x8x1xf32, #tpu.memory_space<vmem>>, %arg4: memref<32x32xf32, #tpu.memory_space<vmem>>, %arg5: memref<1x32xf32, #tpu.memory_space<vmem>>, %arg6: memref<3x3x32xf32, #tpu.memory_space<vmem>>, %arg7: memref<3x1x32xf32, #tpu.memory_space<vmem>>, %arg8: memref<3x1x32xf32, #tpu.memory_space<vmem>>, %arg9: memref<3x1x32xf32, #tpu.memory_space<vmem>>, %arg10: memref<3x32x32xf32, #tpu.memory_space<vmem>>, %arg11: memref<3x1x32xf32, #tpu.memory_space<vmem>>, %arg12: memref<3x1x32xf32, #tpu.memory_space<vmem>>, %arg13: memref<3x1x32xf32, #tpu.memory_space<vmem>>, %arg14: memref<32x32xf32, #tpu.memory_space<vmem>>, %arg15: memref<1x32xf32, #tpu.memory_space<vmem>>, %arg16: memref<1x8x32xf32, #tpu.memory_space<vmem>>) attributes {dimension_semantics = [#tpu.dimension_semantics<parallel>], iteration_bounds = array<i64: 2>, scalar_prefetch = 0 : i64, scratch_operands = 0 : i64, tpu.core_type = #tpu.core_type<tc>, window_params = [{transform_indices = @transform_0, window_bounds = array<i64: 1, 8, 32>}, {transform_indices = @transform_1, window_bounds = array<i64: 1, 1, 32>}, {transform_indices = @transform_2, window_bounds = array<i64: 1, 8, 1>}, {pipeline_mode = #tpu.pipeline_mode<synchronous>, transform_indices = @transform_3, window_bounds = array<i64: 32, 32>}, {pipeline_mode = #tpu.pipeline_mode<synchronous>, transform_indices = @transform_4, window_bounds = array<i64: 1, 32>}, {pipeline_mode = #tpu.pipeline_mode<synchronous>, transform_indices = @transform_5, window_bounds = array<i64: 3, 3, 32>}, {pipeline_mode = #tpu.pipeline_mode<synchronous>, transform_indices = @transform_6, window_bounds = array<i64: 3, 1, 32>}, {pipeline_mode = #tpu.pipeline_mode<synchronous>, transform_indices = @transform_7, window_bounds = array<i64: 3, 1, 32>}, {pipeline_mode = #tpu.pipeline_mode<synchronous>, transform_indices = @transform_8, window_bounds = array<i64: 3, 1, 32>}, {pipeline_mode = #tpu.pipeline_mode<synchronous>, transform_indices = @transform_9, window_bounds = array<i64: 3, 32, 32>}, {pipeline_mode = #tpu.pipeline_mode<synchronous>, transform_indices = @transform_10, window_bounds = array<i64: 3, 1, 32>}, {pipeline_mode = #tpu.pipeline_mode<synchronous>, transform_indices = @transform_11, window_bounds = array<i64: 3, 1, 32>}, {pipeline_mode = #tpu.pipeline_mode<synchronous>, transform_indices = @transform_12, window_bounds = array<i64: 3, 1, 32>}, {pipeline_mode = #tpu.pipeline_mode<synchronous>, transform_indices = @transform_13, window_bounds = array<i64: 32, 32>}, {pipeline_mode = #tpu.pipeline_mode<synchronous>, transform_indices = @transform_14, window_bounds = array<i64: 1, 32>}, {transform_indices = @transform_15, window_bounds = array<i64: 1, 8, 32>}]} {
    %c0 = arith.constant 0 : index
    %c0_0 = arith.constant 0 : index
    %c0_1 = arith.constant 0 : index
    %0 = vector.load %arg1[%c0, %c0_0, %c0_1] : memref<1x8x32xf32, #tpu.memory_space<vmem>>, vector<1x8x32xf32>
    %1 = vector.shape_cast %0 : vector<1x8x32xf32> to vector<8x32xf32>
    %c0_2 = arith.constant 0 : index
    %c0_3 = arith.constant 0 : index
    %c0_4 = arith.constant 0 : index
    %2 = vector.load %arg2[%c0_2, %c0_3, %c0_4] : memref<1x1x32xf32, #tpu.memory_space<vmem>>, vector<1x1x32xf32>
    %3 = vector.shape_cast %2 : vector<1x1x32xf32> to vector<1x32xf32>
    %c0_5 = arith.constant 0 : index
    %c0_6 = arith.constant 0 : index
    %c0_7 = arith.constant 0 : index
    %4 = vector.load %arg3[%c0_5, %c0_6, %c0_7] : memref<1x8x1xf32, #tpu.memory_space<vmem>>, vector<1x8x1xf32>
    %5 = vector.shape_cast %4 : vector<1x8x1xf32> to vector<8x1xf32>
    %c0_8 = arith.constant 0 : index
    %c0_9 = arith.constant 0 : index
    %6 = vector.load %arg4[%c0_8, %c0_9] : memref<32x32xf32, #tpu.memory_space<vmem>>, vector<32x32xf32>
    %cst = arith.constant dense<0.000000e+00> : vector<8x32xf32>
    %7 = tpu.matmul %1, %6, %cst {dimension_numbers = #tpu.dot_dimension_numbers<[1], [0], [0], [1], [0, 0, 1, 1], [], []>} : vector<8x32xf32>, vector<32x32xf32>, vector<8x32xf32> -> vector<8x32xf32>
    %c0_10 = arith.constant 0 : index
    %c0_11 = arith.constant 0 : index
    %8 = vector.load %arg5[%c0_10, %c0_11] : memref<1x32xf32, #tpu.memory_space<vmem>>, vector<1x32xf32>
    %9 = vector.broadcast %8 : vector<1x32xf32> to vector<8x32xf32>
    %10 = arith.addf %7, %9 : vector<8x32xf32>
    %11 = vector.broadcast %3 : vector<1x32xf32> to vector<8x32xf32>
    %12 = arith.addf %10, %11 : vector<8x32xf32>
    %13 = tpu.iota {dimensions = array<i32: 0>} : vector<8x1xi32>
    %c0_12 = arith.constant 0 : index
    %c0_13 = arith.constant 0 : index
    %c0_14 = arith.constant 0 : index
    %14 = vector.load %arg6[%c0_12, %c0_13, %c0_14] : memref<3x3x32xf32, #tpu.memory_space<vmem>>, vector<1x3x32xf32>
    %15 = vector.shape_cast %14 : vector<1x3x32xf32> to vector<3x32xf32>
    %16 = vector.broadcast %5 : vector<8x1xf32> to vector<8x32xf32>
    %17 = arith.mulf %12, %16 : vector<8x32xf32>
    %18 = vector.extract_strided_slice %15 {offsets = [1, 0], sizes = [1, 32], strides = [1, 1]} : vector<3x32xf32> to vector<1x32xf32>
    %19 = vector.broadcast %18 : vector<1x32xf32> to vector<8x32xf32>
    %20 = arith.mulf %17, %19 : vector<8x32xf32>
    %c1_i32 = arith.constant 1 : i32
    %21 = tpu.dynamic_rotate %17 by %c1_i32 dim 0 : vector<8x32xf32>, i32 -> vector<8x32xf32>
    %c-1_i32 = arith.constant -1 : i32
    %22 = vector.broadcast %c-1_i32 : i32 to vector<8x1xi32>
    %23 = arith.addi %13, %22 : vector<8x1xi32>
    %c0_i32 = arith.constant 0 : i32
    %24 = vector.broadcast %c0_i32 : i32 to vector<8x1xi32>
    %25 = arith.cmpi sge, %23, %24 : vector<8x1xi32>
    %c-1_i32_15 = arith.constant -1 : i32
    %26 = vector.broadcast %c-1_i32_15 : i32 to vector<8x1xi32>
    %27 = arith.addi %13, %26 : vector<8x1xi32>
    %c8_i32 = arith.constant 8 : i32
    %28 = vector.broadcast %c8_i32 : i32 to vector<8x1xi32>
    %29 = arith.cmpi slt, %27, %28 : vector<8x1xi32>
    %30 = arith.andi %25, %29 : vector<8x1xi1>
    %cst_16 = arith.constant 0.000000e+00 : f32
    %31 = vector.shape_cast %30 : vector<8x1xi1> to vector<8x1xi1>
    %32 = vector.broadcast %31 : vector<8x1xi1> to vector<8x32xi1>
    %33 = vector.broadcast %cst_16 : f32 to vector<8x32xf32>
    %34 = arith.select %32, %21, %33 : vector<8x32xi1>, vector<8x32xf32>
    %35 = vector.extract_strided_slice %15 {offsets = [0, 0], sizes = [1, 32], strides = [1, 1]} : vector<3x32xf32> to vector<1x32xf32>
    %36 = vector.broadcast %35 : vector<1x32xf32> to vector<8x32xf32>
    %37 = arith.mulf %34, %36 : vector<8x32xf32>
    %38 = arith.addf %20, %37 : vector<8x32xf32>
    %c7_i32 = arith.constant 7 : i32
    %39 = tpu.dynamic_rotate %17 by %c7_i32 dim 0 : vector<8x32xf32>, i32 -> vector<8x32xf32>
    %c1_i32_17 = arith.constant 1 : i32
    %40 = vector.broadcast %c1_i32_17 : i32 to vector<8x1xi32>
    %41 = arith.addi %13, %40 : vector<8x1xi32>
    %c0_i32_18 = arith.constant 0 : i32
    %42 = vector.broadcast %c0_i32_18 : i32 to vector<8x1xi32>
    %43 = arith.cmpi sge, %41, %42 : vector<8x1xi32>
    %c1_i32_19 = arith.constant 1 : i32
    %44 = vector.broadcast %c1_i32_19 : i32 to vector<8x1xi32>
    %45 = arith.addi %13, %44 : vector<8x1xi32>
    %c8_i32_20 = arith.constant 8 : i32
    %46 = vector.broadcast %c8_i32_20 : i32 to vector<8x1xi32>
    %47 = arith.cmpi slt, %45, %46 : vector<8x1xi32>
    %48 = arith.andi %43, %47 : vector<8x1xi1>
    %cst_21 = arith.constant 0.000000e+00 : f32
    %49 = vector.shape_cast %48 : vector<8x1xi1> to vector<8x1xi1>
    %50 = vector.broadcast %49 : vector<8x1xi1> to vector<8x32xi1>
    %51 = vector.broadcast %cst_21 : f32 to vector<8x32xf32>
    %52 = arith.select %50, %39, %51 : vector<8x32xi1>, vector<8x32xf32>
    %53 = vector.extract_strided_slice %15 {offsets = [2, 0], sizes = [1, 32], strides = [1, 1]} : vector<3x32xf32> to vector<1x32xf32>
    %54 = vector.broadcast %53 : vector<1x32xf32> to vector<8x32xf32>
    %55 = arith.mulf %52, %54 : vector<8x32xf32>
    %56 = arith.addf %38, %55 : vector<8x32xf32>
    %c0_22 = arith.constant 0 : index
    %c0_23 = arith.constant 0 : index
    %c0_24 = arith.constant 0 : index
    %57 = vector.load %arg7[%c0_22, %c0_23, %c0_24] : memref<3x1x32xf32, #tpu.memory_space<vmem>>, vector<1x1x32xf32>
    %58 = vector.shape_cast %57 : vector<1x1x32xf32> to vector<1x32xf32>
    %59 = vector.broadcast %58 : vector<1x32xf32> to vector<8x32xf32>
    %60 = arith.addf %56, %59 : vector<8x32xf32>
    %c0_25 = arith.constant 0 : index
    %c0_26 = arith.constant 0 : index
    %c0_27 = arith.constant 0 : index
    %61 = vector.load %arg8[%c0_25, %c0_26, %c0_27] : memref<3x1x32xf32, #tpu.memory_space<vmem>>, vector<1x1x32xf32>
    %62 = vector.shape_cast %61 : vector<1x1x32xf32> to vector<1x32xf32>
    %c0_28 = arith.constant 0 : index
    %c0_29 = arith.constant 0 : index
    %c0_30 = arith.constant 0 : index
    %63 = vector.load %arg9[%c0_28, %c0_29, %c0_30] : memref<3x1x32xf32, #tpu.memory_space<vmem>>, vector<1x1x32xf32>
    %64 = vector.shape_cast %63 : vector<1x1x32xf32> to vector<1x32xf32>
    %cst_31 = arith.constant dense<0.000000e+00> : vector<8xf32>
    %65 = vector.multi_reduction <add>, %60, %cst_31 [1] : vector<8x32xf32> to vector<8xf32>
    %66 = vector.shape_cast %65 : vector<8xf32> to vector<8x1xf32>
    %cst_32 = arith.constant 3.200000e+01 : f32
    %67 = vector.broadcast %cst_32 : f32 to vector<8x1xf32>
    %68 = arith.divf %66, %67 : vector<8x1xf32>
    %69 = vector.broadcast %68 : vector<8x1xf32> to vector<8x32xf32>
    %70 = arith.subf %60, %69 : vector<8x32xf32>
    %71 = arith.mulf %70, %70 : vector<8x32xf32>
    %cst_33 = arith.constant dense<0.000000e+00> : vector<8xf32>
    %72 = vector.multi_reduction <add>, %71, %cst_33 [1] : vector<8x32xf32> to vector<8xf32>
    %73 = vector.shape_cast %72 : vector<8xf32> to vector<8x1xf32>
    %cst_34 = arith.constant 3.200000e+01 : f32
    %74 = vector.broadcast %cst_34 : f32 to vector<8x1xf32>
    %75 = arith.divf %73, %74 : vector<8x1xf32>
    %76 = vector.broadcast %68 : vector<8x1xf32> to vector<8x32xf32>
    %77 = arith.subf %60, %76 : vector<8x32xf32>
    %cst_35 = arith.constant 9.99999974E-6 : f32
    %78 = vector.broadcast %cst_35 : f32 to vector<8x1xf32>
    %79 = arith.addf %75, %78 : vector<8x1xf32>
    %80 = math.rsqrt %79 : vector<8x1xf32>
    %81 = vector.broadcast %80 : vector<8x1xf32> to vector<8x32xf32>
    %82 = arith.mulf %77, %81 : vector<8x32xf32>
    %83 = vector.broadcast %62 : vector<1x32xf32> to vector<8x32xf32>
    %84 = arith.mulf %82, %83 : vector<8x32xf32>
    %85 = vector.broadcast %64 : vector<1x32xf32> to vector<8x32xf32>
    %86 = arith.addf %84, %85 : vector<8x32xf32>
    %cst_36 = arith.constant 5.000000e-01 : f32
    %87 = vector.broadcast %cst_36 : f32 to vector<8x32xf32>
    %88 = arith.mulf %87, %86 : vector<8x32xf32>
    %cst_37 = arith.constant 0.707106769 : f32
    %89 = vector.broadcast %cst_37 : f32 to vector<8x32xf32>
    %90 = arith.mulf %86, %89 : vector<8x32xf32>
    %cst_38 = arith.constant 0.000000e+00 : f32
    %91 = vector.broadcast %cst_38 : f32 to vector<8x32xf32>
    %92 = arith.cmpf oge, %90, %91 : vector<8x32xf32>
    %cst_39 = arith.constant 1.000000e+00 : f32
    %cst_40 = arith.constant -1.000000e+00 : f32
    %93 = vector.broadcast %cst_39 : f32 to vector<8x32xf32>
    %94 = vector.broadcast %cst_40 : f32 to vector<8x32xf32>
    %95 = arith.select %92, %93, %94 : vector<8x32xi1>, vector<8x32xf32>
    %96 = math.absf %90 : vector<8x32xf32>
    %cst_41 = arith.constant 0.327591091 : f32
    %97 = vector.broadcast %cst_41 : f32 to vector<8x32xf32>
    %98 = arith.mulf %97, %96 : vector<8x32xf32>
    %cst_42 = arith.constant 1.000000e+00 : f32
    %99 = vector.broadcast %cst_42 : f32 to vector<8x32xf32>
    %100 = arith.addf %99, %98 : vector<8x32xf32>
    %cst_43 = arith.constant 1.000000e+00 : f32
    %101 = vector.broadcast %cst_43 : f32 to vector<8x32xf32>
    %102 = arith.divf %101, %100 : vector<8x32xf32>
    %cst_44 = arith.constant 1.06140542 : f32
    %103 = vector.broadcast %cst_44 : f32 to vector<8x32xf32>
    %104 = arith.mulf %103, %102 : vector<8x32xf32>
    %cst_45 = arith.constant 1.45315206 : f32
    %105 = vector.broadcast %cst_45 : f32 to vector<8x32xf32>
    %106 = arith.subf %104, %105 : vector<8x32xf32>
    %107 = arith.mulf %106, %102 : vector<8x32xf32>
    %cst_46 = arith.constant 1.42141378 : f32
    %108 = vector.broadcast %cst_46 : f32 to vector<8x32xf32>
    %109 = arith.addf %107, %108 : vector<8x32xf32>
    %110 = arith.mulf %109, %102 : vector<8x32xf32>
    %cst_47 = arith.constant 0.284496725 : f32
    %111 = vector.broadcast %cst_47 : f32 to vector<8x32xf32>
    %112 = arith.subf %110, %111 : vector<8x32xf32>
    %113 = arith.mulf %112, %102 : vector<8x32xf32>
    %cst_48 = arith.constant 0.254829586 : f32
    %114 = vector.broadcast %cst_48 : f32 to vector<8x32xf32>
    %115 = arith.addf %113, %114 : vector<8x32xf32>
    %116 = arith.mulf %115, %102 : vector<8x32xf32>
    %cst_49 = arith.constant 0.000000e+00 : f32
    %117 = vector.broadcast %cst_49 : f32 to vector<8x32xf32>
    %118 = arith.subf %117, %96 : vector<8x32xf32>
    %119 = arith.mulf %118, %96 : vector<8x32xf32>
    %120 = math.exp %119 : vector<8x32xf32>
    %121 = arith.mulf %116, %120 : vector<8x32xf32>
    %cst_50 = arith.constant 1.000000e+00 : f32
    %122 = vector.broadcast %cst_50 : f32 to vector<8x32xf32>
    %123 = arith.subf %122, %121 : vector<8x32xf32>
    %124 = arith.mulf %95, %123 : vector<8x32xf32>
    %cst_51 = arith.constant 1.000000e+00 : f32
    %125 = vector.broadcast %cst_51 : f32 to vector<8x32xf32>
    %126 = arith.addf %125, %124 : vector<8x32xf32>
    %127 = arith.mulf %88, %126 : vector<8x32xf32>
    %c0_52 = arith.constant 0 : index
    %c0_53 = arith.constant 0 : index
    %c0_54 = arith.constant 0 : index
    %128 = vector.load %arg10[%c0_52, %c0_53, %c0_54] : memref<3x32x32xf32, #tpu.memory_space<vmem>>, vector<1x32x32xf32>
    %129 = vector.shape_cast %128 : vector<1x32x32xf32> to vector<32x32xf32>
    %cst_55 = arith.constant dense<0.000000e+00> : vector<8x32xf32>
    %130 = tpu.matmul %127, %129, %cst_55 {dimension_numbers = #tpu.dot_dimension_numbers<[1], [0], [0], [1], [0, 0, 1, 1], [], []>} : vector<8x32xf32>, vector<32x32xf32>, vector<8x32xf32> -> vector<8x32xf32>
    %c0_56 = arith.constant 0 : index
    %c0_57 = arith.constant 0 : index
    %c0_58 = arith.constant 0 : index
    %131 = vector.load %arg11[%c0_56, %c0_57, %c0_58] : memref<3x1x32xf32, #tpu.memory_space<vmem>>, vector<1x1x32xf32>
    %132 = vector.shape_cast %131 : vector<1x1x32xf32> to vector<1x32xf32>
    %133 = vector.broadcast %132 : vector<1x32xf32> to vector<8x32xf32>
    %134 = arith.addf %130, %133 : vector<8x32xf32>
    %c0_59 = arith.constant 0 : index
    %c0_60 = arith.constant 0 : index
    %c0_61 = arith.constant 0 : index
    %135 = vector.load %arg12[%c0_59, %c0_60, %c0_61] : memref<3x1x32xf32, #tpu.memory_space<vmem>>, vector<1x1x32xf32>
    %136 = vector.shape_cast %135 : vector<1x1x32xf32> to vector<1x32xf32>
    %c0_62 = arith.constant 0 : index
    %c0_63 = arith.constant 0 : index
    %c0_64 = arith.constant 0 : index
    %137 = vector.load %arg13[%c0_62, %c0_63, %c0_64] : memref<3x1x32xf32, #tpu.memory_space<vmem>>, vector<1x1x32xf32>
    %138 = vector.shape_cast %137 : vector<1x1x32xf32> to vector<1x32xf32>
    %cst_65 = arith.constant dense<0.000000e+00> : vector<8xf32>
    %139 = vector.multi_reduction <add>, %134, %cst_65 [1] : vector<8x32xf32> to vector<8xf32>
    %140 = vector.shape_cast %139 : vector<8xf32> to vector<8x1xf32>
    %cst_66 = arith.constant 3.200000e+01 : f32
    %141 = vector.broadcast %cst_66 : f32 to vector<8x1xf32>
    %142 = arith.divf %140, %141 : vector<8x1xf32>
    %143 = vector.broadcast %142 : vector<8x1xf32> to vector<8x32xf32>
    %144 = arith.subf %134, %143 : vector<8x32xf32>
    %145 = arith.mulf %144, %144 : vector<8x32xf32>
    %cst_67 = arith.constant dense<0.000000e+00> : vector<8xf32>
    %146 = vector.multi_reduction <add>, %145, %cst_67 [1] : vector<8x32xf32> to vector<8xf32>
    %147 = vector.shape_cast %146 : vector<8xf32> to vector<8x1xf32>
    %cst_68 = arith.constant 3.200000e+01 : f32
    %148 = vector.broadcast %cst_68 : f32 to vector<8x1xf32>
    %149 = arith.divf %147, %148 : vector<8x1xf32>
    %150 = vector.broadcast %142 : vector<8x1xf32> to vector<8x32xf32>
    %151 = arith.subf %134, %150 : vector<8x32xf32>
    %cst_69 = arith.constant 9.99999974E-6 : f32
    %152 = vector.broadcast %cst_69 : f32 to vector<8x1xf32>
    %153 = arith.addf %149, %152 : vector<8x1xf32>
    %154 = math.rsqrt %153 : vector<8x1xf32>
    %155 = vector.broadcast %154 : vector<8x1xf32> to vector<8x32xf32>
    %156 = arith.mulf %151, %155 : vector<8x32xf32>
    %157 = vector.broadcast %136 : vector<1x32xf32> to vector<8x32xf32>
    %158 = arith.mulf %156, %157 : vector<8x32xf32>
    %159 = vector.broadcast %138 : vector<1x32xf32> to vector<8x32xf32>
    %160 = arith.addf %158, %159 : vector<8x32xf32>
    %cst_70 = arith.constant 5.000000e-01 : f32
    %161 = vector.broadcast %cst_70 : f32 to vector<8x32xf32>
    %162 = arith.mulf %161, %160 : vector<8x32xf32>
    %cst_71 = arith.constant 0.707106769 : f32
    %163 = vector.broadcast %cst_71 : f32 to vector<8x32xf32>
    %164 = arith.mulf %160, %163 : vector<8x32xf32>
    %cst_72 = arith.constant 0.000000e+00 : f32
    %165 = vector.broadcast %cst_72 : f32 to vector<8x32xf32>
    %166 = arith.cmpf oge, %164, %165 : vector<8x32xf32>
    %cst_73 = arith.constant 1.000000e+00 : f32
    %cst_74 = arith.constant -1.000000e+00 : f32
    %167 = vector.broadcast %cst_73 : f32 to vector<8x32xf32>
    %168 = vector.broadcast %cst_74 : f32 to vector<8x32xf32>
    %169 = arith.select %166, %167, %168 : vector<8x32xi1>, vector<8x32xf32>
    %170 = math.absf %164 : vector<8x32xf32>
    %cst_75 = arith.constant 0.327591091 : f32
    %171 = vector.broadcast %cst_75 : f32 to vector<8x32xf32>
    %172 = arith.mulf %171, %170 : vector<8x32xf32>
    %cst_76 = arith.constant 1.000000e+00 : f32
    %173 = vector.broadcast %cst_76 : f32 to vector<8x32xf32>
    %174 = arith.addf %173, %172 : vector<8x32xf32>
    %cst_77 = arith.constant 1.000000e+00 : f32
    %175 = vector.broadcast %cst_77 : f32 to vector<8x32xf32>
    %176 = arith.divf %175, %174 : vector<8x32xf32>
    %cst_78 = arith.constant 1.06140542 : f32
    %177 = vector.broadcast %cst_78 : f32 to vector<8x32xf32>
    %178 = arith.mulf %177, %176 : vector<8x32xf32>
    %cst_79 = arith.constant 1.45315206 : f32
    %179 = vector.broadcast %cst_79 : f32 to vector<8x32xf32>
    %180 = arith.subf %178, %179 : vector<8x32xf32>
    %181 = arith.mulf %180, %176 : vector<8x32xf32>
    %cst_80 = arith.constant 1.42141378 : f32
    %182 = vector.broadcast %cst_80 : f32 to vector<8x32xf32>
    %183 = arith.addf %181, %182 : vector<8x32xf32>
    %184 = arith.mulf %183, %176 : vector<8x32xf32>
    %cst_81 = arith.constant 0.284496725 : f32
    %185 = vector.broadcast %cst_81 : f32 to vector<8x32xf32>
    %186 = arith.subf %184, %185 : vector<8x32xf32>
    %187 = arith.mulf %186, %176 : vector<8x32xf32>
    %cst_82 = arith.constant 0.254829586 : f32
    %188 = vector.broadcast %cst_82 : f32 to vector<8x32xf32>
    %189 = arith.addf %187, %188 : vector<8x32xf32>
    %190 = arith.mulf %189, %176 : vector<8x32xf32>
    %cst_83 = arith.constant 0.000000e+00 : f32
    %191 = vector.broadcast %cst_83 : f32 to vector<8x32xf32>
    %192 = arith.subf %191, %170 : vector<8x32xf32>
    %193 = arith.mulf %192, %170 : vector<8x32xf32>
    %194 = math.exp %193 : vector<8x32xf32>
    %195 = arith.mulf %190, %194 : vector<8x32xf32>
    %cst_84 = arith.constant 1.000000e+00 : f32
    %196 = vector.broadcast %cst_84 : f32 to vector<8x32xf32>
    %197 = arith.subf %196, %195 : vector<8x32xf32>
    %198 = arith.mulf %169, %197 : vector<8x32xf32>
    %cst_85 = arith.constant 1.000000e+00 : f32
    %199 = vector.broadcast %cst_85 : f32 to vector<8x32xf32>
    %200 = arith.addf %199, %198 : vector<8x32xf32>
    %201 = arith.mulf %162, %200 : vector<8x32xf32>
    %202 = arith.addf %12, %201 : vector<8x32xf32>
    %c1 = arith.constant 1 : index
    %c0_86 = arith.constant 0 : index
    %c0_87 = arith.constant 0 : index
    %203 = vector.load %arg6[%c1, %c0_86, %c0_87] : memref<3x3x32xf32, #tpu.memory_space<vmem>>, vector<1x3x32xf32>
    %204 = vector.shape_cast %203 : vector<1x3x32xf32> to vector<3x32xf32>
    %205 = vector.broadcast %5 : vector<8x1xf32> to vector<8x32xf32>
    %206 = arith.mulf %202, %205 : vector<8x32xf32>
    %207 = vector.extract_strided_slice %204 {offsets = [1, 0], sizes = [1, 32], strides = [1, 1]} : vector<3x32xf32> to vector<1x32xf32>
    %208 = vector.broadcast %207 : vector<1x32xf32> to vector<8x32xf32>
    %209 = arith.mulf %206, %208 : vector<8x32xf32>
    %c3_i32 = arith.constant 3 : i32
    %210 = tpu.dynamic_rotate %206 by %c3_i32 dim 0 : vector<8x32xf32>, i32 -> vector<8x32xf32>
    %c-3_i32 = arith.constant -3 : i32
    %211 = vector.broadcast %c-3_i32 : i32 to vector<8x1xi32>
    %212 = arith.addi %13, %211 : vector<8x1xi32>
    %c0_i32_88 = arith.constant 0 : i32
    %213 = vector.broadcast %c0_i32_88 : i32 to vector<8x1xi32>
    %214 = arith.cmpi sge, %212, %213 : vector<8x1xi32>
    %c-3_i32_89 = arith.constant -3 : i32
    %215 = vector.broadcast %c-3_i32_89 : i32 to vector<8x1xi32>
    %216 = arith.addi %13, %215 : vector<8x1xi32>
    %c8_i32_90 = arith.constant 8 : i32
    %217 = vector.broadcast %c8_i32_90 : i32 to vector<8x1xi32>
    %218 = arith.cmpi slt, %216, %217 : vector<8x1xi32>
    %219 = arith.andi %214, %218 : vector<8x1xi1>
    %cst_91 = arith.constant 0.000000e+00 : f32
    %220 = vector.shape_cast %219 : vector<8x1xi1> to vector<8x1xi1>
    %221 = vector.broadcast %220 : vector<8x1xi1> to vector<8x32xi1>
    %222 = vector.broadcast %cst_91 : f32 to vector<8x32xf32>
    %223 = arith.select %221, %210, %222 : vector<8x32xi1>, vector<8x32xf32>
    %224 = vector.extract_strided_slice %204 {offsets = [0, 0], sizes = [1, 32], strides = [1, 1]} : vector<3x32xf32> to vector<1x32xf32>
    %225 = vector.broadcast %224 : vector<1x32xf32> to vector<8x32xf32>
    %226 = arith.mulf %223, %225 : vector<8x32xf32>
    %227 = arith.addf %209, %226 : vector<8x32xf32>
    %c5_i32 = arith.constant 5 : i32
    %228 = tpu.dynamic_rotate %206 by %c5_i32 dim 0 : vector<8x32xf32>, i32 -> vector<8x32xf32>
    %c3_i32_92 = arith.constant 3 : i32
    %229 = vector.broadcast %c3_i32_92 : i32 to vector<8x1xi32>
    %230 = arith.addi %13, %229 : vector<8x1xi32>
    %c0_i32_93 = arith.constant 0 : i32
    %231 = vector.broadcast %c0_i32_93 : i32 to vector<8x1xi32>
    %232 = arith.cmpi sge, %230, %231 : vector<8x1xi32>
    %c3_i32_94 = arith.constant 3 : i32
    %233 = vector.broadcast %c3_i32_94 : i32 to vector<8x1xi32>
    %234 = arith.addi %13, %233 : vector<8x1xi32>
    %c8_i32_95 = arith.constant 8 : i32
    %235 = vector.broadcast %c8_i32_95 : i32 to vector<8x1xi32>
    %236 = arith.cmpi slt, %234, %235 : vector<8x1xi32>
    %237 = arith.andi %232, %236 : vector<8x1xi1>
    %cst_96 = arith.constant 0.000000e+00 : f32
    %238 = vector.shape_cast %237 : vector<8x1xi1> to vector<8x1xi1>
    %239 = vector.broadcast %238 : vector<8x1xi1> to vector<8x32xi1>
    %240 = vector.broadcast %cst_96 : f32 to vector<8x32xf32>
    %241 = arith.select %239, %228, %240 : vector<8x32xi1>, vector<8x32xf32>
    %242 = vector.extract_strided_slice %204 {offsets = [2, 0], sizes = [1, 32], strides = [1, 1]} : vector<3x32xf32> to vector<1x32xf32>
    %243 = vector.broadcast %242 : vector<1x32xf32> to vector<8x32xf32>
    %244 = arith.mulf %241, %243 : vector<8x32xf32>
    %245 = arith.addf %227, %244 : vector<8x32xf32>
    %c1_97 = arith.constant 1 : index
    %c0_98 = arith.constant 0 : index
    %c0_99 = arith.constant 0 : index
    %246 = vector.load %arg7[%c1_97, %c0_98, %c0_99] : memref<3x1x32xf32, #tpu.memory_space<vmem>>, vector<1x1x32xf32>
    %247 = vector.shape_cast %246 : vector<1x1x32xf32> to vector<1x32xf32>
    %248 = vector.broadcast %247 : vector<1x32xf32> to vector<8x32xf32>
    %249 = arith.addf %245, %248 : vector<8x32xf32>
    %c1_100 = arith.constant 1 : index
    %c0_101 = arith.constant 0 : index
    %c0_102 = arith.constant 0 : index
    %250 = vector.load %arg8[%c1_100, %c0_101, %c0_102] : memref<3x1x32xf32, #tpu.memory_space<vmem>>, vector<1x1x32xf32>
    %251 = vector.shape_cast %250 : vector<1x1x32xf32> to vector<1x32xf32>
    %c1_103 = arith.constant 1 : index
    %c0_104 = arith.constant 0 : index
    %c0_105 = arith.constant 0 : index
    %252 = vector.load %arg9[%c1_103, %c0_104, %c0_105] : memref<3x1x32xf32, #tpu.memory_space<vmem>>, vector<1x1x32xf32>
    %253 = vector.shape_cast %252 : vector<1x1x32xf32> to vector<1x32xf32>
    %cst_106 = arith.constant dense<0.000000e+00> : vector<8xf32>
    %254 = vector.multi_reduction <add>, %249, %cst_106 [1] : vector<8x32xf32> to vector<8xf32>
    %255 = vector.shape_cast %254 : vector<8xf32> to vector<8x1xf32>
    %cst_107 = arith.constant 3.200000e+01 : f32
    %256 = vector.broadcast %cst_107 : f32 to vector<8x1xf32>
    %257 = arith.divf %255, %256 : vector<8x1xf32>
    %258 = vector.broadcast %257 : vector<8x1xf32> to vector<8x32xf32>
    %259 = arith.subf %249, %258 : vector<8x32xf32>
    %260 = arith.mulf %259, %259 : vector<8x32xf32>
    %cst_108 = arith.constant dense<0.000000e+00> : vector<8xf32>
    %261 = vector.multi_reduction <add>, %260, %cst_108 [1] : vector<8x32xf32> to vector<8xf32>
    %262 = vector.shape_cast %261 : vector<8xf32> to vector<8x1xf32>
    %cst_109 = arith.constant 3.200000e+01 : f32
    %263 = vector.broadcast %cst_109 : f32 to vector<8x1xf32>
    %264 = arith.divf %262, %263 : vector<8x1xf32>
    %265 = vector.broadcast %257 : vector<8x1xf32> to vector<8x32xf32>
    %266 = arith.subf %249, %265 : vector<8x32xf32>
    %cst_110 = arith.constant 9.99999974E-6 : f32
    %267 = vector.broadcast %cst_110 : f32 to vector<8x1xf32>
    %268 = arith.addf %264, %267 : vector<8x1xf32>
    %269 = math.rsqrt %268 : vector<8x1xf32>
    %270 = vector.broadcast %269 : vector<8x1xf32> to vector<8x32xf32>
    %271 = arith.mulf %266, %270 : vector<8x32xf32>
    %272 = vector.broadcast %251 : vector<1x32xf32> to vector<8x32xf32>
    %273 = arith.mulf %271, %272 : vector<8x32xf32>
    %274 = vector.broadcast %253 : vector<1x32xf32> to vector<8x32xf32>
    %275 = arith.addf %273, %274 : vector<8x32xf32>
    %cst_111 = arith.constant 5.000000e-01 : f32
    %276 = vector.broadcast %cst_111 : f32 to vector<8x32xf32>
    %277 = arith.mulf %276, %275 : vector<8x32xf32>
    %cst_112 = arith.constant 0.707106769 : f32
    %278 = vector.broadcast %cst_112 : f32 to vector<8x32xf32>
    %279 = arith.mulf %275, %278 : vector<8x32xf32>
    %cst_113 = arith.constant 0.000000e+00 : f32
    %280 = vector.broadcast %cst_113 : f32 to vector<8x32xf32>
    %281 = arith.cmpf oge, %279, %280 : vector<8x32xf32>
    %cst_114 = arith.constant 1.000000e+00 : f32
    %cst_115 = arith.constant -1.000000e+00 : f32
    %282 = vector.broadcast %cst_114 : f32 to vector<8x32xf32>
    %283 = vector.broadcast %cst_115 : f32 to vector<8x32xf32>
    %284 = arith.select %281, %282, %283 : vector<8x32xi1>, vector<8x32xf32>
    %285 = math.absf %279 : vector<8x32xf32>
    %cst_116 = arith.constant 0.327591091 : f32
    %286 = vector.broadcast %cst_116 : f32 to vector<8x32xf32>
    %287 = arith.mulf %286, %285 : vector<8x32xf32>
    %cst_117 = arith.constant 1.000000e+00 : f32
    %288 = vector.broadcast %cst_117 : f32 to vector<8x32xf32>
    %289 = arith.addf %288, %287 : vector<8x32xf32>
    %cst_118 = arith.constant 1.000000e+00 : f32
    %290 = vector.broadcast %cst_118 : f32 to vector<8x32xf32>
    %291 = arith.divf %290, %289 : vector<8x32xf32>
    %cst_119 = arith.constant 1.06140542 : f32
    %292 = vector.broadcast %cst_119 : f32 to vector<8x32xf32>
    %293 = arith.mulf %292, %291 : vector<8x32xf32>
    %cst_120 = arith.constant 1.45315206 : f32
    %294 = vector.broadcast %cst_120 : f32 to vector<8x32xf32>
    %295 = arith.subf %293, %294 : vector<8x32xf32>
    %296 = arith.mulf %295, %291 : vector<8x32xf32>
    %cst_121 = arith.constant 1.42141378 : f32
    %297 = vector.broadcast %cst_121 : f32 to vector<8x32xf32>
    %298 = arith.addf %296, %297 : vector<8x32xf32>
    %299 = arith.mulf %298, %291 : vector<8x32xf32>
    %cst_122 = arith.constant 0.284496725 : f32
    %300 = vector.broadcast %cst_122 : f32 to vector<8x32xf32>
    %301 = arith.subf %299, %300 : vector<8x32xf32>
    %302 = arith.mulf %301, %291 : vector<8x32xf32>
    %cst_123 = arith.constant 0.254829586 : f32
    %303 = vector.broadcast %cst_123 : f32 to vector<8x32xf32>
    %304 = arith.addf %302, %303 : vector<8x32xf32>
    %305 = arith.mulf %304, %291 : vector<8x32xf32>
    %cst_124 = arith.constant 0.000000e+00 : f32
    %306 = vector.broadcast %cst_124 : f32 to vector<8x32xf32>
    %307 = arith.subf %306, %285 : vector<8x32xf32>
    %308 = arith.mulf %307, %285 : vector<8x32xf32>
    %309 = math.exp %308 : vector<8x32xf32>
    %310 = arith.mulf %305, %309 : vector<8x32xf32>
    %cst_125 = arith.constant 1.000000e+00 : f32
    %311 = vector.broadcast %cst_125 : f32 to vector<8x32xf32>
    %312 = arith.subf %311, %310 : vector<8x32xf32>
    %313 = arith.mulf %284, %312 : vector<8x32xf32>
    %cst_126 = arith.constant 1.000000e+00 : f32
    %314 = vector.broadcast %cst_126 : f32 to vector<8x32xf32>
    %315 = arith.addf %314, %313 : vector<8x32xf32>
    %316 = arith.mulf %277, %315 : vector<8x32xf32>
    %c1_127 = arith.constant 1 : index
    %c0_128 = arith.constant 0 : index
    %c0_129 = arith.constant 0 : index
    %317 = vector.load %arg10[%c1_127, %c0_128, %c0_129] : memref<3x32x32xf32, #tpu.memory_space<vmem>>, vector<1x32x32xf32>
    %318 = vector.shape_cast %317 : vector<1x32x32xf32> to vector<32x32xf32>
    %cst_130 = arith.constant dense<0.000000e+00> : vector<8x32xf32>
    %319 = tpu.matmul %316, %318, %cst_130 {dimension_numbers = #tpu.dot_dimension_numbers<[1], [0], [0], [1], [0, 0, 1, 1], [], []>} : vector<8x32xf32>, vector<32x32xf32>, vector<8x32xf32> -> vector<8x32xf32>
    %c1_131 = arith.constant 1 : index
    %c0_132 = arith.constant 0 : index
    %c0_133 = arith.constant 0 : index
    %320 = vector.load %arg11[%c1_131, %c0_132, %c0_133] : memref<3x1x32xf32, #tpu.memory_space<vmem>>, vector<1x1x32xf32>
    %321 = vector.shape_cast %320 : vector<1x1x32xf32> to vector<1x32xf32>
    %322 = vector.broadcast %321 : vector<1x32xf32> to vector<8x32xf32>
    %323 = arith.addf %319, %322 : vector<8x32xf32>
    %c1_134 = arith.constant 1 : index
    %c0_135 = arith.constant 0 : index
    %c0_136 = arith.constant 0 : index
    %324 = vector.load %arg12[%c1_134, %c0_135, %c0_136] : memref<3x1x32xf32, #tpu.memory_space<vmem>>, vector<1x1x32xf32>
    %325 = vector.shape_cast %324 : vector<1x1x32xf32> to vector<1x32xf32>
    %c1_137 = arith.constant 1 : index
    %c0_138 = arith.constant 0 : index
    %c0_139 = arith.constant 0 : index
    %326 = vector.load %arg13[%c1_137, %c0_138, %c0_139] : memref<3x1x32xf32, #tpu.memory_space<vmem>>, vector<1x1x32xf32>
    %327 = vector.shape_cast %326 : vector<1x1x32xf32> to vector<1x32xf32>
    %cst_140 = arith.constant dense<0.000000e+00> : vector<8xf32>
    %328 = vector.multi_reduction <add>, %323, %cst_140 [1] : vector<8x32xf32> to vector<8xf32>
    %329 = vector.shape_cast %328 : vector<8xf32> to vector<8x1xf32>
    %cst_141 = arith.constant 3.200000e+01 : f32
    %330 = vector.broadcast %cst_141 : f32 to vector<8x1xf32>
    %331 = arith.divf %329, %330 : vector<8x1xf32>
    %332 = vector.broadcast %331 : vector<8x1xf32> to vector<8x32xf32>
    %333 = arith.subf %323, %332 : vector<8x32xf32>
    %334 = arith.mulf %333, %333 : vector<8x32xf32>
    %cst_142 = arith.constant dense<0.000000e+00> : vector<8xf32>
    %335 = vector.multi_reduction <add>, %334, %cst_142 [1] : vector<8x32xf32> to vector<8xf32>
    %336 = vector.shape_cast %335 : vector<8xf32> to vector<8x1xf32>
    %cst_143 = arith.constant 3.200000e+01 : f32
    %337 = vector.broadcast %cst_143 : f32 to vector<8x1xf32>
    %338 = arith.divf %336, %337 : vector<8x1xf32>
    %339 = vector.broadcast %331 : vector<8x1xf32> to vector<8x32xf32>
    %340 = arith.subf %323, %339 : vector<8x32xf32>
    %cst_144 = arith.constant 9.99999974E-6 : f32
    %341 = vector.broadcast %cst_144 : f32 to vector<8x1xf32>
    %342 = arith.addf %338, %341 : vector<8x1xf32>
    %343 = math.rsqrt %342 : vector<8x1xf32>
    %344 = vector.broadcast %343 : vector<8x1xf32> to vector<8x32xf32>
    %345 = arith.mulf %340, %344 : vector<8x32xf32>
    %346 = vector.broadcast %325 : vector<1x32xf32> to vector<8x32xf32>
    %347 = arith.mulf %345, %346 : vector<8x32xf32>
    %348 = vector.broadcast %327 : vector<1x32xf32> to vector<8x32xf32>
    %349 = arith.addf %347, %348 : vector<8x32xf32>
    %cst_145 = arith.constant 5.000000e-01 : f32
    %350 = vector.broadcast %cst_145 : f32 to vector<8x32xf32>
    %351 = arith.mulf %350, %349 : vector<8x32xf32>
    %cst_146 = arith.constant 0.707106769 : f32
    %352 = vector.broadcast %cst_146 : f32 to vector<8x32xf32>
    %353 = arith.mulf %349, %352 : vector<8x32xf32>
    %cst_147 = arith.constant 0.000000e+00 : f32
    %354 = vector.broadcast %cst_147 : f32 to vector<8x32xf32>
    %355 = arith.cmpf oge, %353, %354 : vector<8x32xf32>
    %cst_148 = arith.constant 1.000000e+00 : f32
    %cst_149 = arith.constant -1.000000e+00 : f32
    %356 = vector.broadcast %cst_148 : f32 to vector<8x32xf32>
    %357 = vector.broadcast %cst_149 : f32 to vector<8x32xf32>
    %358 = arith.select %355, %356, %357 : vector<8x32xi1>, vector<8x32xf32>
    %359 = math.absf %353 : vector<8x32xf32>
    %cst_150 = arith.constant 0.327591091 : f32
    %360 = vector.broadcast %cst_150 : f32 to vector<8x32xf32>
    %361 = arith.mulf %360, %359 : vector<8x32xf32>
    %cst_151 = arith.constant 1.000000e+00 : f32
    %362 = vector.broadcast %cst_151 : f32 to vector<8x32xf32>
    %363 = arith.addf %362, %361 : vector<8x32xf32>
    %cst_152 = arith.constant 1.000000e+00 : f32
    %364 = vector.broadcast %cst_152 : f32 to vector<8x32xf32>
    %365 = arith.divf %364, %363 : vector<8x32xf32>
    %cst_153 = arith.constant 1.06140542 : f32
    %366 = vector.broadcast %cst_153 : f32 to vector<8x32xf32>
    %367 = arith.mulf %366, %365 : vector<8x32xf32>
    %cst_154 = arith.constant 1.45315206 : f32
    %368 = vector.broadcast %cst_154 : f32 to vector<8x32xf32>
    %369 = arith.subf %367, %368 : vector<8x32xf32>
    %370 = arith.mulf %369, %365 : vector<8x32xf32>
    %cst_155 = arith.constant 1.42141378 : f32
    %371 = vector.broadcast %cst_155 : f32 to vector<8x32xf32>
    %372 = arith.addf %370, %371 : vector<8x32xf32>
    %373 = arith.mulf %372, %365 : vector<8x32xf32>
    %cst_156 = arith.constant 0.284496725 : f32
    %374 = vector.broadcast %cst_156 : f32 to vector<8x32xf32>
    %375 = arith.subf %373, %374 : vector<8x32xf32>
    %376 = arith.mulf %375, %365 : vector<8x32xf32>
    %cst_157 = arith.constant 0.254829586 : f32
    %377 = vector.broadcast %cst_157 : f32 to vector<8x32xf32>
    %378 = arith.addf %376, %377 : vector<8x32xf32>
    %379 = arith.mulf %378, %365 : vector<8x32xf32>
    %cst_158 = arith.constant 0.000000e+00 : f32
    %380 = vector.broadcast %cst_158 : f32 to vector<8x32xf32>
    %381 = arith.subf %380, %359 : vector<8x32xf32>
    %382 = arith.mulf %381, %359 : vector<8x32xf32>
    %383 = math.exp %382 : vector<8x32xf32>
    %384 = arith.mulf %379, %383 : vector<8x32xf32>
    %cst_159 = arith.constant 1.000000e+00 : f32
    %385 = vector.broadcast %cst_159 : f32 to vector<8x32xf32>
    %386 = arith.subf %385, %384 : vector<8x32xf32>
    %387 = arith.mulf %358, %386 : vector<8x32xf32>
    %cst_160 = arith.constant 1.000000e+00 : f32
    %388 = vector.broadcast %cst_160 : f32 to vector<8x32xf32>
    %389 = arith.addf %388, %387 : vector<8x32xf32>
    %390 = arith.mulf %351, %389 : vector<8x32xf32>
    %391 = arith.addf %202, %390 : vector<8x32xf32>
    %c2 = arith.constant 2 : index
    %c0_161 = arith.constant 0 : index
    %c0_162 = arith.constant 0 : index
    %392 = vector.load %arg6[%c2, %c0_161, %c0_162] : memref<3x3x32xf32, #tpu.memory_space<vmem>>, vector<1x3x32xf32>
    %393 = vector.shape_cast %392 : vector<1x3x32xf32> to vector<3x32xf32>
    %394 = vector.broadcast %5 : vector<8x1xf32> to vector<8x32xf32>
    %395 = arith.mulf %391, %394 : vector<8x32xf32>
    %396 = vector.extract_strided_slice %393 {offsets = [1, 0], sizes = [1, 32], strides = [1, 1]} : vector<3x32xf32> to vector<1x32xf32>
    %397 = vector.broadcast %396 : vector<1x32xf32> to vector<8x32xf32>
    %398 = arith.mulf %395, %397 : vector<8x32xf32>
    %c1_i32_163 = arith.constant 1 : i32
    %399 = tpu.dynamic_rotate %395 by %c1_i32_163 dim 0 : vector<8x32xf32>, i32 -> vector<8x32xf32>
    %c-9_i32 = arith.constant -9 : i32
    %400 = vector.broadcast %c-9_i32 : i32 to vector<8x1xi32>
    %401 = arith.addi %13, %400 : vector<8x1xi32>
    %c0_i32_164 = arith.constant 0 : i32
    %402 = vector.broadcast %c0_i32_164 : i32 to vector<8x1xi32>
    %403 = arith.cmpi sge, %401, %402 : vector<8x1xi32>
    %c-9_i32_165 = arith.constant -9 : i32
    %404 = vector.broadcast %c-9_i32_165 : i32 to vector<8x1xi32>
    %405 = arith.addi %13, %404 : vector<8x1xi32>
    %c8_i32_166 = arith.constant 8 : i32
    %406 = vector.broadcast %c8_i32_166 : i32 to vector<8x1xi32>
    %407 = arith.cmpi slt, %405, %406 : vector<8x1xi32>
    %408 = arith.andi %403, %407 : vector<8x1xi1>
    %cst_167 = arith.constant 0.000000e+00 : f32
    %409 = vector.shape_cast %408 : vector<8x1xi1> to vector<8x1xi1>
    %410 = vector.broadcast %409 : vector<8x1xi1> to vector<8x32xi1>
    %411 = vector.broadcast %cst_167 : f32 to vector<8x32xf32>
    %412 = arith.select %410, %399, %411 : vector<8x32xi1>, vector<8x32xf32>
    %413 = vector.extract_strided_slice %393 {offsets = [0, 0], sizes = [1, 32], strides = [1, 1]} : vector<3x32xf32> to vector<1x32xf32>
    %414 = vector.broadcast %413 : vector<1x32xf32> to vector<8x32xf32>
    %415 = arith.mulf %412, %414 : vector<8x32xf32>
    %416 = arith.addf %398, %415 : vector<8x32xf32>
    %c7_i32_168 = arith.constant 7 : i32
    %417 = tpu.dynamic_rotate %395 by %c7_i32_168 dim 0 : vector<8x32xf32>, i32 -> vector<8x32xf32>
    %c9_i32 = arith.constant 9 : i32
    %418 = vector.broadcast %c9_i32 : i32 to vector<8x1xi32>
    %419 = arith.addi %13, %418 : vector<8x1xi32>
    %c0_i32_169 = arith.constant 0 : i32
    %420 = vector.broadcast %c0_i32_169 : i32 to vector<8x1xi32>
    %421 = arith.cmpi sge, %419, %420 : vector<8x1xi32>
    %c9_i32_170 = arith.constant 9 : i32
    %422 = vector.broadcast %c9_i32_170 : i32 to vector<8x1xi32>
    %423 = arith.addi %13, %422 : vector<8x1xi32>
    %c8_i32_171 = arith.constant 8 : i32
    %424 = vector.broadcast %c8_i32_171 : i32 to vector<8x1xi32>
    %425 = arith.cmpi slt, %423, %424 : vector<8x1xi32>
    %426 = arith.andi %421, %425 : vector<8x1xi1>
    %cst_172 = arith.constant 0.000000e+00 : f32
    %427 = vector.shape_cast %426 : vector<8x1xi1> to vector<8x1xi1>
    %428 = vector.broadcast %427 : vector<8x1xi1> to vector<8x32xi1>
    %429 = vector.broadcast %cst_172 : f32 to vector<8x32xf32>
    %430 = arith.select %428, %417, %429 : vector<8x32xi1>, vector<8x32xf32>
    %431 = vector.extract_strided_slice %393 {offsets = [2, 0], sizes = [1, 32], strides = [1, 1]} : vector<3x32xf32> to vector<1x32xf32>
    %432 = vector.broadcast %431 : vector<1x32xf32> to vector<8x32xf32>
    %433 = arith.mulf %430, %432 : vector<8x32xf32>
    %434 = arith.addf %416, %433 : vector<8x32xf32>
    %c2_173 = arith.constant 2 : index
    %c0_174 = arith.constant 0 : index
    %c0_175 = arith.constant 0 : index
    %435 = vector.load %arg7[%c2_173, %c0_174, %c0_175] : memref<3x1x32xf32, #tpu.memory_space<vmem>>, vector<1x1x32xf32>
    %436 = vector.shape_cast %435 : vector<1x1x32xf32> to vector<1x32xf32>
    %437 = vector.broadcast %436 : vector<1x32xf32> to vector<8x32xf32>
    %438 = arith.addf %434, %437 : vector<8x32xf32>
    %c2_176 = arith.constant 2 : index
    %c0_177 = arith.constant 0 : index
    %c0_178 = arith.constant 0 : index
    %439 = vector.load %arg8[%c2_176, %c0_177, %c0_178] : memref<3x1x32xf32, #tpu.memory_space<vmem>>, vector<1x1x32xf32>
    %440 = vector.shape_cast %439 : vector<1x1x32xf32> to vector<1x32xf32>
    %c2_179 = arith.constant 2 : index
    %c0_180 = arith.constant 0 : index
    %c0_181 = arith.constant 0 : index
    %441 = vector.load %arg9[%c2_179, %c0_180, %c0_181] : memref<3x1x32xf32, #tpu.memory_space<vmem>>, vector<1x1x32xf32>
    %442 = vector.shape_cast %441 : vector<1x1x32xf32> to vector<1x32xf32>
    %cst_182 = arith.constant dense<0.000000e+00> : vector<8xf32>
    %443 = vector.multi_reduction <add>, %438, %cst_182 [1] : vector<8x32xf32> to vector<8xf32>
    %444 = vector.shape_cast %443 : vector<8xf32> to vector<8x1xf32>
    %cst_183 = arith.constant 3.200000e+01 : f32
    %445 = vector.broadcast %cst_183 : f32 to vector<8x1xf32>
    %446 = arith.divf %444, %445 : vector<8x1xf32>
    %447 = vector.broadcast %446 : vector<8x1xf32> to vector<8x32xf32>
    %448 = arith.subf %438, %447 : vector<8x32xf32>
    %449 = arith.mulf %448, %448 : vector<8x32xf32>
    %cst_184 = arith.constant dense<0.000000e+00> : vector<8xf32>
    %450 = vector.multi_reduction <add>, %449, %cst_184 [1] : vector<8x32xf32> to vector<8xf32>
    %451 = vector.shape_cast %450 : vector<8xf32> to vector<8x1xf32>
    %cst_185 = arith.constant 3.200000e+01 : f32
    %452 = vector.broadcast %cst_185 : f32 to vector<8x1xf32>
    %453 = arith.divf %451, %452 : vector<8x1xf32>
    %454 = vector.broadcast %446 : vector<8x1xf32> to vector<8x32xf32>
    %455 = arith.subf %438, %454 : vector<8x32xf32>
    %cst_186 = arith.constant 9.99999974E-6 : f32
    %456 = vector.broadcast %cst_186 : f32 to vector<8x1xf32>
    %457 = arith.addf %453, %456 : vector<8x1xf32>
    %458 = math.rsqrt %457 : vector<8x1xf32>
    %459 = vector.broadcast %458 : vector<8x1xf32> to vector<8x32xf32>
    %460 = arith.mulf %455, %459 : vector<8x32xf32>
    %461 = vector.broadcast %440 : vector<1x32xf32> to vector<8x32xf32>
    %462 = arith.mulf %460, %461 : vector<8x32xf32>
    %463 = vector.broadcast %442 : vector<1x32xf32> to vector<8x32xf32>
    %464 = arith.addf %462, %463 : vector<8x32xf32>
    %cst_187 = arith.constant 5.000000e-01 : f32
    %465 = vector.broadcast %cst_187 : f32 to vector<8x32xf32>
    %466 = arith.mulf %465, %464 : vector<8x32xf32>
    %cst_188 = arith.constant 0.707106769 : f32
    %467 = vector.broadcast %cst_188 : f32 to vector<8x32xf32>
    %468 = arith.mulf %464, %467 : vector<8x32xf32>
    %cst_189 = arith.constant 0.000000e+00 : f32
    %469 = vector.broadcast %cst_189 : f32 to vector<8x32xf32>
    %470 = arith.cmpf oge, %468, %469 : vector<8x32xf32>
    %cst_190 = arith.constant 1.000000e+00 : f32
    %cst_191 = arith.constant -1.000000e+00 : f32
    %471 = vector.broadcast %cst_190 : f32 to vector<8x32xf32>
    %472 = vector.broadcast %cst_191 : f32 to vector<8x32xf32>
    %473 = arith.select %470, %471, %472 : vector<8x32xi1>, vector<8x32xf32>
    %474 = math.absf %468 : vector<8x32xf32>
    %cst_192 = arith.constant 0.327591091 : f32
    %475 = vector.broadcast %cst_192 : f32 to vector<8x32xf32>
    %476 = arith.mulf %475, %474 : vector<8x32xf32>
    %cst_193 = arith.constant 1.000000e+00 : f32
    %477 = vector.broadcast %cst_193 : f32 to vector<8x32xf32>
    %478 = arith.addf %477, %476 : vector<8x32xf32>
    %cst_194 = arith.constant 1.000000e+00 : f32
    %479 = vector.broadcast %cst_194 : f32 to vector<8x32xf32>
    %480 = arith.divf %479, %478 : vector<8x32xf32>
    %cst_195 = arith.constant 1.06140542 : f32
    %481 = vector.broadcast %cst_195 : f32 to vector<8x32xf32>
    %482 = arith.mulf %481, %480 : vector<8x32xf32>
    %cst_196 = arith.constant 1.45315206 : f32
    %483 = vector.broadcast %cst_196 : f32 to vector<8x32xf32>
    %484 = arith.subf %482, %483 : vector<8x32xf32>
    %485 = arith.mulf %484, %480 : vector<8x32xf32>
    %cst_197 = arith.constant 1.42141378 : f32
    %486 = vector.broadcast %cst_197 : f32 to vector<8x32xf32>
    %487 = arith.addf %485, %486 : vector<8x32xf32>
    %488 = arith.mulf %487, %480 : vector<8x32xf32>
    %cst_198 = arith.constant 0.284496725 : f32
    %489 = vector.broadcast %cst_198 : f32 to vector<8x32xf32>
    %490 = arith.subf %488, %489 : vector<8x32xf32>
    %491 = arith.mulf %490, %480 : vector<8x32xf32>
    %cst_199 = arith.constant 0.254829586 : f32
    %492 = vector.broadcast %cst_199 : f32 to vector<8x32xf32>
    %493 = arith.addf %491, %492 : vector<8x32xf32>
    %494 = arith.mulf %493, %480 : vector<8x32xf32>
    %cst_200 = arith.constant 0.000000e+00 : f32
    %495 = vector.broadcast %cst_200 : f32 to vector<8x32xf32>
    %496 = arith.subf %495, %474 : vector<8x32xf32>
    %497 = arith.mulf %496, %474 : vector<8x32xf32>
    %498 = math.exp %497 : vector<8x32xf32>
    %499 = arith.mulf %494, %498 : vector<8x32xf32>
    %cst_201 = arith.constant 1.000000e+00 : f32
    %500 = vector.broadcast %cst_201 : f32 to vector<8x32xf32>
    %501 = arith.subf %500, %499 : vector<8x32xf32>
    %502 = arith.mulf %473, %501 : vector<8x32xf32>
    %cst_202 = arith.constant 1.000000e+00 : f32
    %503 = vector.broadcast %cst_202 : f32 to vector<8x32xf32>
    %504 = arith.addf %503, %502 : vector<8x32xf32>
    %505 = arith.mulf %466, %504 : vector<8x32xf32>
    %c2_203 = arith.constant 2 : index
    %c0_204 = arith.constant 0 : index
    %c0_205 = arith.constant 0 : index
    %506 = vector.load %arg10[%c2_203, %c0_204, %c0_205] : memref<3x32x32xf32, #tpu.memory_space<vmem>>, vector<1x32x32xf32>
    %507 = vector.shape_cast %506 : vector<1x32x32xf32> to vector<32x32xf32>
    %cst_206 = arith.constant dense<0.000000e+00> : vector<8x32xf32>
    %508 = tpu.matmul %505, %507, %cst_206 {dimension_numbers = #tpu.dot_dimension_numbers<[1], [0], [0], [1], [0, 0, 1, 1], [], []>} : vector<8x32xf32>, vector<32x32xf32>, vector<8x32xf32> -> vector<8x32xf32>
    %c2_207 = arith.constant 2 : index
    %c0_208 = arith.constant 0 : index
    %c0_209 = arith.constant 0 : index
    %509 = vector.load %arg11[%c2_207, %c0_208, %c0_209] : memref<3x1x32xf32, #tpu.memory_space<vmem>>, vector<1x1x32xf32>
    %510 = vector.shape_cast %509 : vector<1x1x32xf32> to vector<1x32xf32>
    %511 = vector.broadcast %510 : vector<1x32xf32> to vector<8x32xf32>
    %512 = arith.addf %508, %511 : vector<8x32xf32>
    %c2_210 = arith.constant 2 : index
    %c0_211 = arith.constant 0 : index
    %c0_212 = arith.constant 0 : index
    %513 = vector.load %arg12[%c2_210, %c0_211, %c0_212] : memref<3x1x32xf32, #tpu.memory_space<vmem>>, vector<1x1x32xf32>
    %514 = vector.shape_cast %513 : vector<1x1x32xf32> to vector<1x32xf32>
    %c2_213 = arith.constant 2 : index
    %c0_214 = arith.constant 0 : index
    %c0_215 = arith.constant 0 : index
    %515 = vector.load %arg13[%c2_213, %c0_214, %c0_215] : memref<3x1x32xf32, #tpu.memory_space<vmem>>, vector<1x1x32xf32>
    %516 = vector.shape_cast %515 : vector<1x1x32xf32> to vector<1x32xf32>
    %cst_216 = arith.constant dense<0.000000e+00> : vector<8xf32>
    %517 = vector.multi_reduction <add>, %512, %cst_216 [1] : vector<8x32xf32> to vector<8xf32>
    %518 = vector.shape_cast %517 : vector<8xf32> to vector<8x1xf32>
    %cst_217 = arith.constant 3.200000e+01 : f32
    %519 = vector.broadcast %cst_217 : f32 to vector<8x1xf32>
    %520 = arith.divf %518, %519 : vector<8x1xf32>
    %521 = vector.broadcast %520 : vector<8x1xf32> to vector<8x32xf32>
    %522 = arith.subf %512, %521 : vector<8x32xf32>
    %523 = arith.mulf %522, %522 : vector<8x32xf32>
    %cst_218 = arith.constant dense<0.000000e+00> : vector<8xf32>
    %524 = vector.multi_reduction <add>, %523, %cst_218 [1] : vector<8x32xf32> to vector<8xf32>
    %525 = vector.shape_cast %524 : vector<8xf32> to vector<8x1xf32>
    %cst_219 = arith.constant 3.200000e+01 : f32
    %526 = vector.broadcast %cst_219 : f32 to vector<8x1xf32>
    %527 = arith.divf %525, %526 : vector<8x1xf32>
    %528 = vector.broadcast %520 : vector<8x1xf32> to vector<8x32xf32>
    %529 = arith.subf %512, %528 : vector<8x32xf32>
    %cst_220 = arith.constant 9.99999974E-6 : f32
    %530 = vector.broadcast %cst_220 : f32 to vector<8x1xf32>
    %531 = arith.addf %527, %530 : vector<8x1xf32>
    %532 = math.rsqrt %531 : vector<8x1xf32>
    %533 = vector.broadcast %532 : vector<8x1xf32> to vector<8x32xf32>
    %534 = arith.mulf %529, %533 : vector<8x32xf32>
    %535 = vector.broadcast %514 : vector<1x32xf32> to vector<8x32xf32>
    %536 = arith.mulf %534, %535 : vector<8x32xf32>
    %537 = vector.broadcast %516 : vector<1x32xf32> to vector<8x32xf32>
    %538 = arith.addf %536, %537 : vector<8x32xf32>
    %cst_221 = arith.constant 5.000000e-01 : f32
    %539 = vector.broadcast %cst_221 : f32 to vector<8x32xf32>
    %540 = arith.mulf %539, %538 : vector<8x32xf32>
    %cst_222 = arith.constant 0.707106769 : f32
    %541 = vector.broadcast %cst_222 : f32 to vector<8x32xf32>
    %542 = arith.mulf %538, %541 : vector<8x32xf32>
    %cst_223 = arith.constant 0.000000e+00 : f32
    %543 = vector.broadcast %cst_223 : f32 to vector<8x32xf32>
    %544 = arith.cmpf oge, %542, %543 : vector<8x32xf32>
    %cst_224 = arith.constant 1.000000e+00 : f32
    %cst_225 = arith.constant -1.000000e+00 : f32
    %545 = vector.broadcast %cst_224 : f32 to vector<8x32xf32>
    %546 = vector.broadcast %cst_225 : f32 to vector<8x32xf32>
    %547 = arith.select %544, %545, %546 : vector<8x32xi1>, vector<8x32xf32>
    %548 = math.absf %542 : vector<8x32xf32>
    %cst_226 = arith.constant 0.327591091 : f32
    %549 = vector.broadcast %cst_226 : f32 to vector<8x32xf32>
    %550 = arith.mulf %549, %548 : vector<8x32xf32>
    %cst_227 = arith.constant 1.000000e+00 : f32
    %551 = vector.broadcast %cst_227 : f32 to vector<8x32xf32>
    %552 = arith.addf %551, %550 : vector<8x32xf32>
    %cst_228 = arith.constant 1.000000e+00 : f32
    %553 = vector.broadcast %cst_228 : f32 to vector<8x32xf32>
    %554 = arith.divf %553, %552 : vector<8x32xf32>
    %cst_229 = arith.constant 1.06140542 : f32
    %555 = vector.broadcast %cst_229 : f32 to vector<8x32xf32>
    %556 = arith.mulf %555, %554 : vector<8x32xf32>
    %cst_230 = arith.constant 1.45315206 : f32
    %557 = vector.broadcast %cst_230 : f32 to vector<8x32xf32>
    %558 = arith.subf %556, %557 : vector<8x32xf32>
    %559 = arith.mulf %558, %554 : vector<8x32xf32>
    %cst_231 = arith.constant 1.42141378 : f32
    %560 = vector.broadcast %cst_231 : f32 to vector<8x32xf32>
    %561 = arith.addf %559, %560 : vector<8x32xf32>
    %562 = arith.mulf %561, %554 : vector<8x32xf32>
    %cst_232 = arith.constant 0.284496725 : f32
    %563 = vector.broadcast %cst_232 : f32 to vector<8x32xf32>
    %564 = arith.subf %562, %563 : vector<8x32xf32>
    %565 = arith.mulf %564, %554 : vector<8x32xf32>
    %cst_233 = arith.constant 0.254829586 : f32
    %566 = vector.broadcast %cst_233 : f32 to vector<8x32xf32>
    %567 = arith.addf %565, %566 : vector<8x32xf32>
    %568 = arith.mulf %567, %554 : vector<8x32xf32>
    %cst_234 = arith.constant 0.000000e+00 : f32
    %569 = vector.broadcast %cst_234 : f32 to vector<8x32xf32>
    %570 = arith.subf %569, %548 : vector<8x32xf32>
    %571 = arith.mulf %570, %548 : vector<8x32xf32>
    %572 = math.exp %571 : vector<8x32xf32>
    %573 = arith.mulf %568, %572 : vector<8x32xf32>
    %cst_235 = arith.constant 1.000000e+00 : f32
    %574 = vector.broadcast %cst_235 : f32 to vector<8x32xf32>
    %575 = arith.subf %574, %573 : vector<8x32xf32>
    %576 = arith.mulf %547, %575 : vector<8x32xf32>
    %cst_236 = arith.constant 1.000000e+00 : f32
    %577 = vector.broadcast %cst_236 : f32 to vector<8x32xf32>
    %578 = arith.addf %577, %576 : vector<8x32xf32>
    %579 = arith.mulf %540, %578 : vector<8x32xf32>
    %580 = arith.addf %391, %579 : vector<8x32xf32>
    %581 = vector.broadcast %5 : vector<8x1xf32> to vector<8x32xf32>
    %582 = arith.mulf %580, %581 : vector<8x32xf32>
    %c0_237 = arith.constant 0 : index
    %c0_238 = arith.constant 0 : index
    %583 = vector.load %arg14[%c0_237, %c0_238] : memref<32x32xf32, #tpu.memory_space<vmem>>, vector<32x32xf32>
    %cst_239 = arith.constant dense<0.000000e+00> : vector<8x32xf32>
    %584 = tpu.matmul %582, %583, %cst_239 {dimension_numbers = #tpu.dot_dimension_numbers<[1], [0], [0], [1], [0, 0, 1, 1], [], []>} : vector<8x32xf32>, vector<32x32xf32>, vector<8x32xf32> -> vector<8x32xf32>
    %c0_240 = arith.constant 0 : index
    %c0_241 = arith.constant 0 : index
    %585 = vector.load %arg15[%c0_240, %c0_241] : memref<1x32xf32, #tpu.memory_space<vmem>>, vector<1x32xf32>
    %586 = vector.broadcast %585 : vector<1x32xf32> to vector<8x32xf32>
    %587 = arith.addf %584, %586 : vector<8x32xf32>
    %588 = vector.broadcast %5 : vector<8x1xf32> to vector<8x32xf32>
    %589 = arith.mulf %587, %588 : vector<8x32xf32>
    %c0_242 = arith.constant 0 : index
    %c0_243 = arith.constant 0 : index
    %c0_244 = arith.constant 0 : index
    %590 = vector.load %arg16[%c0_242, %c0_243, %c0_244] : memref<1x8x32xf32, #tpu.memory_space<vmem>>, vector<1x8x32xf32>
    %591 = vector.shape_cast %590 : vector<1x8x32xf32> to vector<8x32xf32>
    %592 = vector.shape_cast %589 : vector<8x32xf32> to vector<1x8x32xf32>
    tpu.vector_store %arg16[%c0_242, %c0_243, %c0_244], %592 {strides = array<i32>} : memref<1x8x32xf32, #tpu.memory_space<vmem>>, vector<1x8x32xf32>,
    return
  }
  func.func @transform_0(%arg0: i32) -> (i32, i32, i32) {
    %c0_i32 = arith.constant 0 : i32
    %c0_i32_0 = arith.constant 0 : i32
    %c0_i32_1 = arith.constant 0 : i32
    return %arg0, %c0_i32, %c0_i32_0 : i32, i32, i32
  }
  func.func @transform_1(%arg0: i32) -> (i32, i32, i32) {
    %c0_i32 = arith.constant 0 : i32
    %c0_i32_0 = arith.constant 0 : i32
    %c0_i32_1 = arith.constant 0 : i32
    return %arg0, %c0_i32, %c0_i32_0 : i32, i32, i32
  }
  func.func @transform_2(%arg0: i32) -> (i32, i32, i32) {
    %c0_i32 = arith.constant 0 : i32
    %c0_i32_0 = arith.constant 0 : i32
    %c0_i32_1 = arith.constant 0 : i32
    return %arg0, %c0_i32, %c0_i32_0 : i32, i32, i32
  }
  func.func @transform_3(%arg0: i32) -> (i32, i32) {
    %c0_i32 = arith.constant 0 : i32
    %c0_i32_0 = arith.constant 0 : i32
    %c0_i32_1 = arith.constant 0 : i32
    return %c0_i32, %c0_i32_0 : i32, i32
  }
  func.func @transform_4(%arg0: i32) -> (i32, i32) {
    %c0_i32 = arith.constant 0 : i32
    %c0_i32_0 = arith.constant 0 : i32
    %c0_i32_1 = arith.constant 0 : i32
    return %c0_i32, %c0_i32_0 : i32, i32
  }
  func.func @transform_5(%arg0: i32) -> (i32, i32, i32) {
    %c0_i32 = arith.constant 0 : i32
    %c0_i32_0 = arith.constant 0 : i32
    %c0_i32_1 = arith.constant 0 : i32
    %c0_i32_2 = arith.constant 0 : i32
    return %c0_i32, %c0_i32_0, %c0_i32_1 : i32, i32, i32
  }
  func.func @transform_6(%arg0: i32) -> (i32, i32, i32) {
    %c0_i32 = arith.constant 0 : i32
    %c0_i32_0 = arith.constant 0 : i32
    %c0_i32_1 = arith.constant 0 : i32
    %c0_i32_2 = arith.constant 0 : i32
    return %c0_i32, %c0_i32_0, %c0_i32_1 : i32, i32, i32
  }
  func.func @transform_7(%arg0: i32) -> (i32, i32, i32) {
    %c0_i32 = arith.constant 0 : i32
    %c0_i32_0 = arith.constant 0 : i32
    %c0_i32_1 = arith.constant 0 : i32
    %c0_i32_2 = arith.constant 0 : i32
    return %c0_i32, %c0_i32_0, %c0_i32_1 : i32, i32, i32
  }
  func.func @transform_8(%arg0: i32) -> (i32, i32, i32) {
    %c0_i32 = arith.constant 0 : i32
    %c0_i32_0 = arith.constant 0 : i32
    %c0_i32_1 = arith.constant 0 : i32
    %c0_i32_2 = arith.constant 0 : i32
    return %c0_i32, %c0_i32_0, %c0_i32_1 : i32, i32, i32
  }
  func.func @transform_9(%arg0: i32) -> (i32, i32, i32) {
    %c0_i32 = arith.constant 0 : i32
    %c0_i32_0 = arith.constant 0 : i32
    %c0_i32_1 = arith.constant 0 : i32
    %c0_i32_2 = arith.constant 0 : i32
    return %c0_i32, %c0_i32_0, %c0_i32_1 : i32, i32, i32
  }
  func.func @transform_10(%arg0: i32) -> (i32, i32, i32) {
    %c0_i32 = arith.constant 0 : i32
    %c0_i32_0 = arith.constant 0 : i32
    %c0_i32_1 = arith.constant 0 : i32
    %c0_i32_2 = arith.constant 0 : i32
    return %c0_i32, %c0_i32_0, %c0_i32_1 : i32, i32, i32
  }
  func.func @transform_11(%arg0: i32) -> (i32, i32, i32) {
    %c0_i32 = arith.constant 0 : i32
    %c0_i32_0 = arith.constant 0 : i32
    %c0_i32_1 = arith.constant 0 : i32
    %c0_i32_2 = arith.constant 0 : i32
    return %c0_i32, %c0_i32_0, %c0_i32_1 : i32, i32, i32
  }
  func.func @transform_12(%arg0: i32) -> (i32, i32, i32) {
    %c0_i32 = arith.constant 0 : i32
    %c0_i32_0 = arith.constant 0 : i32
    %c0_i32_1 = arith.constant 0 : i32
    %c0_i32_2 = arith.constant 0 : i32
    return %c0_i32, %c0_i32_0, %c0_i32_1 : i32, i32, i32
  }
  func.func @transform_13(%arg0: i32) -> (i32, i32) {
    %c0_i32 = arith.constant 0 : i32
    %c0_i32_0 = arith.constant 0 : i32
    %c0_i32_1 = arith.constant 0 : i32
    return %c0_i32, %c0_i32_0 : i32, i32
  }
  func.func @transform_14(%arg0: i32) -> (i32, i32) {
    %c0_i32 = arith.constant 0 : i32
    %c0_i32_0 = arith.constant 0 : i32
    %c0_i32_1 = arith.constant 0 : i32
    return %c0_i32, %c0_i32_0 : i32, i32
  }
  func.func @transform_15(%arg0: i32) -> (i32, i32, i32) {
    %c0_i32 = arith.constant 0 : i32
    %c0_i32_0 = arith.constant 0 : i32
    %c0_i32_1 = arith.constant 0 : i32
    return %arg0, %c0_i32, %c0_i32_0 : i32, i32, i32
  }
}

</mosaic_0001>

<llo_original>
// kernel: tpu_custom_call.1
$region0: #{tpu_custom_call.1}
  #allocation0 [shape = 'u32[]', space=smem, size = 0x4, offset = 0x4, fixed_abs, tag = 'smem constant byte address 0x4 - core index']
  #allocation1 [shape = 'u32[144,128]{1,0:T(1,128)}', space=vmem, size = 0x12000, scoped, tag = 'internal scratch']
  %s0 = inlined_call_operand.hbm [shape: f32[2,8,32], index: 0, kind: input, shape index: {}]
  %s1 = inlined_call_operand.hbm [shape: f32[2,1,32], index: 1, kind: input, shape index: {}]
  %s2 = inlined_call_operand.vmem [shape: f32[2,8,1], index: 2, kind: input, shape index: {}]
  %s3 = inlined_call_operand.hbm [shape: f32[32,32], index: 3, kind: input, shape index: {}]
  %s4 = inlined_call_operand.hbm [shape: f32[1,32], index: 4, kind: input, shape index: {}]
  %s5 = inlined_call_operand.hbm [shape: f32[3,3,32], index: 5, kind: input, shape index: {}]
  %s6 = inlined_call_operand.vmem [shape: f32[3,1,32], index: 6, kind: input, shape index: {}]
  %s7 = inlined_call_operand.vmem [shape: f32[3,1,32], index: 7, kind: input, shape index: {}]
  %s8 = inlined_call_operand.vmem [shape: f32[3,1,32], index: 8, kind: input, shape index: {}]
  %s9 = inlined_call_operand.hbm [shape: f32[3,32,32], index: 9, kind: input, shape index: {}]
  %s10 = inlined_call_operand.hbm [shape: f32[3,1,32], index: 10, kind: input, shape index: {}]
  %s11 = inlined_call_operand.hbm [shape: f32[3,1,32], index: 11, kind: input, shape index: {}]
  %s12 = inlined_call_operand.hbm [shape: f32[3,1,32], index: 12, kind: input, shape index: {}]
  %s13 = inlined_call_operand.vmem [shape: f32[32,32], index: 13, kind: input, shape index: {}]
  %s14 = inlined_call_operand.vmem [shape: f32[1,32], index: 14, kind: input, shape index: {}]
  %s15 = inlined_call_operand.hbm [shape: f32[2,8,32], index: 15, kind: output, shape index: {}]
  %s16 = sld [smem:[#allocation0]]
  $region129: #{tpu_custom_call.1} parent=0
    _
  %s18 = ssub.s32 1, %s16
  %s19 = scalar_select 0, %s18, %s16
  $region1: #{tpu_custom_call.1} parent=0
    #allocation2 [shape = 'u8[8192]{0}', space=vmem, size = 0x2000, scoped, tag = 'input window, operand 0']
    #allocation3 [shape = 's32[2]{0}', space=sflag, size = 0x8, scoped, tag = 'scoped memory for tpu_custom_call.1']
    #allocation4 [shape = 's32[2]{0}', space=sflag, size = 0x8, scoped, tag = 'scoped memory for tpu_custom_call.1']
    #allocation5 [shape = 'u8[1024]{0}', space=vmem, size = 0x400, scoped, tag = 'input window, operand 1']
    #allocation6 [shape = 's32[2]{0}', space=sflag, size = 0x8, scoped, tag = 'scoped memory for tpu_custom_call.1']
    #allocation7 [shape = 'u8[16384]{0}', space=vmem, size = 0x4000, scoped, tag = 'input window, operand 3, single buffered']
    #allocation8 [shape = 'u8[512]{0}', space=vmem, size = 0x400, scoped, tag = 'input window, operand 4, single buffered']
    #allocation9 [shape = 's32[1]{0}', space=sflag, size = 0x4, scoped, tag = 'scoped memory for tpu_custom_call.1']
    #allocation10 [shape = 'u8[6144]{0}', space=vmem, size = 0x1800, scoped, tag = 'input window, operand 5, single buffered']
    #allocation11 [shape = 'u8[49152]{0}', space=vmem, size = 0xc000, scoped, tag = 'input window, operand 9, single buffered']
    #allocation12 [shape = 's32[1]{0}', space=sflag, size = 0x4, scoped, tag = 'scoped memory for tpu_custom_call.1']
    #allocation13 [shape = 'u8[1536]{0}', space=vmem, size = 0x800, scoped, tag = 'input window, operand 10, single buffered']
    #allocation14 [shape = 'u8[1536]{0}', space=vmem, size = 0x800, scoped, tag = 'input window, operand 11, single buffered']
    #allocation15 [shape = 's32[1]{0}', space=sflag, size = 0x4, scoped, tag = 'scoped memory for tpu_custom_call.1']
    #allocation16 [shape = 'u8[1536]{0}', space=vmem, size = 0x800, scoped, tag = 'input window, operand 12, single buffered']
    #allocation17 [shape = 'u8[8192]{0}', space=vmem, size = 0x2000, scoped, tag = 'output window, operand 0']
    %20 = vsyncpa [#allocation3], 0
    %s21 = scalar_lea.sflag [#allocation3], 1
    %22 = vsyncpa %s21, 0
    %23 = vsyncpa [#allocation6], 0
    %s24 = scalar_lea.sflag [#allocation6], 1
    %25 = vsyncpa %s24, 0
    %26 = vsyncpa [#allocation9], 0
    %27 = vsyncpa [#allocation12], 0
    %28 = vsyncpa [#allocation15], 0
    %29 = vsyncpa [#allocation4], 0
    %s30 = scalar_lea.sflag [#allocation4], 1
    %31 = vsyncpa %s30, 0
    loop: start=0, step=1, limit=4
    $region2: #{tpu_custom_call.1} parent=1 // loop_pre_header
      _
    $region3: #{tpu_custom_call.1} parent=1 // loop_header
      %s33 = sphi 0, %s37
      %p34 = scmp.ge.s32.totalorder %s33, 4
      %s43 = sphi 0, %s45
      %s46 = sphi 0, %s43
      %s47 = sphi 0, %s46
      %s63 = sphi 0, %s47
      %s69 = sphi 0, %s71
      %s72 = sphi 0, %s69
      %s73 = sphi 0, %s72
      %s89 = sphi 0, %s73
      %s95 = sphi 0, %s97
      %s98 = sphi 0, %s95
      %s99 = sphi 0, %s98
      %s115 = sphi 0, %s99
      %s119 = sphi 0, %s119
      %s121 = sphi 0, %s119
      %s122 = sphi 0, %s121
      %s136 = sphi 0, %s122
      %s140 = sphi 0, %s140
      %s142 = sphi 0, %s140
      %s143 = sphi 0, %s142
      %s157 = sphi 0, %s143
      %s161 = sphi 0, %s161
      %s163 = sphi 0, %s161
      %s164 = sphi 0, %s163
      %s178 = sphi 0, %s164
      %s182 = sphi 0, %s182
      %s184 = sphi 0, %s182
      %s185 = sphi 0, %s184
      %s199 = sphi 0, %s185
      %s203 = sphi 0, %s203
      %s205 = sphi 0, %s203
      %s206 = sphi 0, %s205
      %s220 = sphi 0, %s206
      %s224 = sphi 0, %s224
      %s226 = sphi 0, %s224
      %s227 = sphi 0, %s226
      %s241 = sphi 0, %s227
      %s245 = sphi 0, %s245
      %s247 = sphi 0, %s245
      %s248 = sphi 0, %s247
      %s262 = sphi 0, %s248
      %s266 = sphi 0, %s266
      %s268 = sphi 0, %s266
      %s269 = sphi 0, %s268
      %s283 = sphi 0, %s269
      %s287 = sphi 0, %s287
      %s289 = sphi 0, %s287
      %s290 = sphi 0, %s289
      %s304 = sphi 0, %s290
      %s308 = sphi 0, %s308
      %s310 = sphi 0, %s308
      %s311 = sphi 0, %s310
      %s325 = sphi 0, %s311
      %s329 = sphi 0, %s329
      %s331 = sphi 0, %s329
      %s332 = sphi 0, %s331
      %s346 = sphi 0, %s332
      %s350 = sphi 0, %s350
      %s352 = sphi 0, %s350
      %s353 = sphi 0, %s352
      %s367 = sphi 0, %s353
      %s373 = sphi 0, %s375
      %s376 = sphi 0, %s373
      %s377 = sphi 0, %s376
      %s393 = sphi 0, %s377
    $region4: #{tpu_custom_call.1} parent=1 // loop_header_branch
      %36 = sbr.rel (%p34) target = $region8
    $region5: #{tpu_custom_call.1} parent=1 // loop_body
      %s38 = ssub.s32 %s33, 1
      %s39 = ssub.s32 %s33, 2
      %s40 = sadd.s32 %s33, 1
      %s41 = ssub.s32 %s33, %s40
      %p42 = scmp.eq.s32.totalorder %s41, 0
      %s44 = sadd.s32 %s43, 1
      %s45 = scalar_select %p42, %s43, %s44
      %p48 = pneg %p42
      %p49 = scmp.eq.s32.totalorder %s33, 1
      %p50 = por %p48, %p49
      %p51 = scmp.ne.s32.totalorder %s43, %s46
      %p52 = scmp.eq.s32.totalorder %s33, 0
      %p53 = por %p51, %p52
      %p54 = scmp.ne.s32.totalorder %s43, %s46
      %p55 = scmp.eq.s32.totalorder %s38, 1
      %p56 = por %p54, %p55
      %p57 = scmp.ne.s32.totalorder %s46, %s47
      %p58 = scmp.eq.s32.totalorder %s38, 0
      %p59 = por %p57, %p58
      %p60 = scmp.ne.s32.totalorder %s46, %s47
      %p61 = scmp.eq.s32.totalorder %s39, 1
      %p62 = por %p60, %p61
      %p64 = scmp.ne.s32.totalorder %s47, %s63
      %p65 = scmp.eq.s32.totalorder %s39, 0
      %p66 = por %p64, %p65
      %s67 = ssub.s32 %s33, %s40
      %p68 = scmp.eq.s32.totalorder %s67, 0
      %s70 = sadd.s32 %s69, 1
      %s71 = scalar_select %p68, %s69, %s70
      %p74 = pneg %p68
      %p75 = scmp.eq.s32.totalorder %s33, 1
      %p76 = por %p74, %p75
      %p77 = scmp.ne.s32.totalorder %s69, %s72
      %p78 = scmp.eq.s32.totalorder %s33, 0
      %p79 = por %p77, %p78
      %p80 = scmp.ne.s32.totalorder %s69, %s72
      %p81 = scmp.eq.s32.totalorder %s38, 1
      %p82 = por %p80, %p81
      %p83 = scmp.ne.s32.totalorder %s72, %s73
      %p84 = scmp.eq.s32.totalorder %s38, 0
      %p85 = por %p83, %p84
      %p86 = scmp.ne.s32.totalorder %s72, %s73
      %p87 = scmp.eq.s32.totalorder %s39, 1
      %p88 = por %p86, %p87
      %p90 = scmp.ne.s32.totalorder %s73, %s89
      %p91 = scmp.eq.s32.totalorder %s39, 0
      %p92 = por %p90, %p91
      %s93 = ssub.s32 %s33, %s40
      %p94 = scmp.eq.s32.totalorder %s93, 0
      %s96 = sadd.s32 %s95, 1
      %s97 = scalar_select %p94, %s95, %s96
      %p100 = pneg %p94
      %p101 = scmp.eq.s32.totalorder %s33, 1
      %p102 = por %p100, %p101
      %p103 = scmp.ne.s32.totalorder %s95, %s98
      %p104 = scmp.eq.s32.totalorder %s33, 0
      %p105 = por %p103, %p104
      %p106 = scmp.ne.s32.totalorder %s95, %s98
      %p107 = scmp.eq.s32.totalorder %s38, 1
      %p108 = por %p106, %p107
      %p109 = scmp.ne.s32.totalorder %s98, %s99
      %p110 = scmp.eq.s32.totalorder %s38, 0
      %p111 = por %p109, %p110
      %p112 = scmp.ne.s32.totalorder %s98, %s99
      %p113 = scmp.eq.s32.totalorder %s39, 1
      %p114 = por %p112, %p113
      %p116 = scmp.ne.s32.totalorder %s99, %s115
      %p117 = scmp.eq.s32.totalorder %s39, 0
      %p118 = por %p116, %p117
      %s120 = sadd.s32 %s119, 1
      %p123 = scmp.eq.s32.totalorder %s33, 1
      %p124 = scmp.ne.s32.totalorder %s119, %s121
      %p125 = scmp.eq.s32.totalorder %s33, 0
      %p126 = por %p124, %p125
      %p127 = scmp.ne.s32.totalorder %s119, %s121
      %p128 = scmp.eq.s32.totalorder %s38, 1
      %p129 = por %p127, %p128
      %p130 = scmp.ne.s32.totalorder %s121, %s122
      %p131 = scmp.eq.s32.totalorder %s38, 0
      %p132 = por %p130, %p131
      %p133 = scmp.ne.s32.totalorder %s121, %s122
      %p134 = scmp.eq.s32.totalorder %s39, 1
      %p135 = por %p133, %p134
      %p137 = scmp.ne.s32.totalorder %s122, %s136
      %p138 = scmp.eq.s32.totalorder %s39, 0
      %p139 = por %p137, %p138
      %s141 = sadd.s32 %s140, 1
      %p144 = scmp.eq.s32.totalorder %s33, 1
      %p145 = scmp.ne.s32.totalorder %s140, %s142
      %p146 = scmp.eq.s32.totalorder %s33, 0
      %p147 = por %p145, %p146
      %p148 = scmp.ne.s32.totalorder %s140, %s142
      %p149 = scmp.eq.s32.totalorder %s38, 1
      %p150 = por %p148, %p149
      %p151 = scmp.ne.s32.totalorder %s142, %s143
      %p152 = scmp.eq.s32.totalorder %s38, 0
      %p153 = por %p151, %p152
      %p154 = scmp.ne.s32.totalorder %s142, %s143
      %p155 = scmp.eq.s32.totalorder %s39, 1
      %p156 = por %p154, %p155
      %p158 = scmp.ne.s32.totalorder %s143, %s157
      %p159 = scmp.eq.s32.totalorder %s39, 0
      %p160 = por %p158, %p159
      %s162 = sadd.s32 %s161, 1
      %p165 = scmp.eq.s32.totalorder %s33, 1
      %p166 = scmp.ne.s32.totalorder %s161, %s163
      %p167 = scmp.eq.s32.totalorder %s33, 0
      %p168 = por %p166, %p167
      %p169 = scmp.ne.s32.totalorder %s161, %s163
      %p170 = scmp.eq.s32.totalorder %s38, 1
      %p171 = por %p169, %p170
      %p172 = scmp.ne.s32.totalorder %s163, %s164
      %p173 = scmp.eq.s32.totalorder %s38, 0
      %p174 = por %p172, %p173
      %p175 = scmp.ne.s32.totalorder %s163, %s164
      %p176 = scmp.eq.s32.totalorder %s39, 1
      %p177 = por %p175, %p176
      %p179 = scmp.ne.s32.totalorder %s164, %s178
      %p180 = scmp.eq.s32.totalorder %s39, 0
      %p181 = por %p179, %p180
      %s183 = sadd.s32 %s182, 1
      %p186 = scmp.eq.s32.totalorder %s33, 1
      %p187 = scmp.ne.s32.totalorder %s182, %s184
      %p188 = scmp.eq.s32.totalorder %s33, 0
      %p189 = por %p187, %p188
      %p190 = scmp.ne.s32.totalorder %s182, %s184
      %p191 = scmp.eq.s32.totalorder %s38, 1
      %p192 = por %p190, %p191
      %p193 = scmp.ne.s32.totalorder %s184, %s185
      %p194 = scmp.eq.s32.totalorder %s38, 0
      %p195 = por %p193, %p194
      %p196 = scmp.ne.s32.totalorder %s184, %s185
      %p197 = scmp.eq.s32.totalorder %s39, 1
      %p198 = por %p196, %p197
      %p200 = scmp.ne.s32.totalorder %s185, %s199
      %p201 = scmp.eq.s32.totalorder %s39, 0
      %p202 = por %p200, %p201
      %s204 = sadd.s32 %s203, 1
      %p207 = scmp.eq.s32.totalorder %s33, 1
      %p208 = scmp.ne.s32.totalorder %s203, %s205
      %p209 = scmp.eq.s32.totalorder %s33, 0
      %p210 = por %p208, %p209
      %p211 = scmp.ne.s32.totalorder %s203, %s205
      %p212 = scmp.eq.s32.totalorder %s38, 1
      %p213 = por %p211, %p212
      %p214 = scmp.ne.s32.totalorder %s205, %s206
      %p215 = scmp.eq.s32.totalorder %s38, 0
      %p216 = por %p214, %p215
      %p217 = scmp.ne.s32.totalorder %s205, %s206
      %p218 = scmp.eq.s32.totalorder %s39, 1
      %p219 = por %p217, %p218
      %p221 = scmp.ne.s32.totalorder %s206, %s220
      %p222 = scmp.eq.s32.totalorder %s39, 0
      %p223 = por %p221, %p222
      %s225 = sadd.s32 %s224, 1
      %p228 = scmp.eq.s32.totalorder %s33, 1
      %p229 = scmp.ne.s32.totalorder %s224, %s226
      %p230 = scmp.eq.s32.totalorder %s33, 0
      %p231 = por %p229, %p230
      %p232 = scmp.ne.s32.totalorder %s224, %s226
      %p233 = scmp.eq.s32.totalorder %s38, 1
      %p234 = por %p232, %p233
      %p235 = scmp.ne.s32.totalorder %s226, %s227
      %p236 = scmp.eq.s32.totalorder %s38, 0
      %p237 = por %p235, %p236
      %p238 = scmp.ne.s32.totalorder %s226, %s227
      %p239 = scmp.eq.s32.totalorder %s39, 1
      %p240 = por %p238, %p239
      %p242 = scmp.ne.s32.totalorder %s227, %s241
      %p243 = scmp.eq.s32.totalorder %s39, 0
      %p244 = por %p242, %p243
      %s246 = sadd.s32 %s245, 1
      %p249 = scmp.eq.s32.totalorder %s33, 1
      %p250 = scmp.ne.s32.totalorder %s245, %s247
      %p251 = scmp.eq.s32.totalorder %s33, 0
      %p252 = por %p250, %p251
      %p253 = scmp.ne.s32.totalorder %s245, %s247
      %p254 = scmp.eq.s32.totalorder %s38, 1
      %p255 = por %p253, %p254
      %p256 = scmp.ne.s32.totalorder %s247, %s248
      %p257 = scmp.eq.s32.totalorder %s38, 0
      %p258 = por %p256, %p257
      %p259 = scmp.ne.s32.totalorder %s247, %s248
      %p260 = scmp.eq.s32.totalorder %s39, 1
      %p261 = por %p259, %p260
      %p263 = scmp.ne.s32.totalorder %s248, %s262
      %p264 = scmp.eq.s32.totalorder %s39, 0
      %p265 = por %p263, %p264
      %s267 = sadd.s32 %s266, 1
      %p270 = scmp.eq.s32.totalorder %s33, 1
      %p271 = scmp.ne.s32.totalorder %s266, %s268
      %p272 = scmp.eq.s32.totalorder %s33, 0
      %p273 = por %p271, %p272
      %p274 = scmp.ne.s32.totalorder %s266, %s268
      %p275 = scmp.eq.s32.totalorder %s38, 1
      %p276 = por %p274, %p275
      %p277 = scmp.ne.s32.totalorder %s268, %s269
      %p278 = scmp.eq.s32.totalorder %s38, 0
      %p279 = por %p277, %p278
      %p280 = scmp.ne.s32.totalorder %s268, %s269
      %p281 = scmp.eq.s32.totalorder %s39, 1
      %p282 = por %p280, %p281
      %p284 = scmp.ne.s32.totalorder %s269, %s283
      %p285 = scmp.eq.s32.totalorder %s39, 0
      %p286 = por %p284, %p285
      %s288 = sadd.s32 %s287, 1
      %p291 = scmp.eq.s32.totalorder %s33, 1
      %p292 = scmp.ne.s32.totalorder %s287, %s289
      %p293 = scmp.eq.s32.totalorder %s33, 0
      %p294 = por %p292, %p293
      %p295 = scmp.ne.s32.totalorder %s287, %s289
      %p296 = scmp.eq.s32.totalorder %s38, 1
      %p297 = por %p295, %p296
      %p298 = scmp.ne.s32.totalorder %s289, %s290
      %p299 = scmp.eq.s32.totalorder %s38, 0
      %p300 = por %p298, %p299
      %p301 = scmp.ne.s32.totalorder %s289, %s290
      %p302 = scmp.eq.s32.totalorder %s39, 1
      %p303 = por %p301, %p302
      %p305 = scmp.ne.s32.totalorder %s290, %s304
      %p306 = scmp.eq.s32.totalorder %s39, 0
      %p307 = por %p305, %p306
      %s309 = sadd.s32 %s308, 1
      %p312 = scmp.eq.s32.totalorder %s33, 1
      %p313 = scmp.ne.s32.totalorder %s308, %s310
      %p314 = scmp.eq.s32.totalorder %s33, 0
      %p315 = por %p313, %p314
      %p316 = scmp.ne.s32.totalorder %s308, %s310
      %p317 = scmp.eq.s32.totalorder %s38, 1
      %p318 = por %p316, %p317
      %p319 = scmp.ne.s32.totalorder %s310, %s311
      %p320 = scmp.eq.s32.totalorder %s38, 0
      %p321 = por %p319, %p320
      %p322 = scmp.ne.s32.totalorder %s310, %s311
      %p323 = scmp.eq.s32.totalorder %s39, 1
      %p324 = por %p322, %p323
      %p326 = scmp.ne.s32.totalorder %s311, %s325
      %p327 = scmp.eq.s32.totalorder %s39, 0
      %p328 = por %p326, %p327
      %s330 = sadd.s32 %s329, 1
      %p333 = scmp.eq.s32.totalorder %s33, 1
      %p334 = scmp.ne.s32.totalorder %s329, %s331
      %p335 = scmp.eq.s32.totalorder %s33, 0
      %p336 = por %p334, %p335
      %p337 = scmp.ne.s32.totalorder %s329, %s331
      %p338 = scmp.eq.s32.totalorder %s38, 1
      %p339 = por %p337, %p338
      %p340 = scmp.ne.s32.totalorder %s331, %s332
      %p341 = scmp.eq.s32.totalorder %s38, 0
      %p342 = por %p340, %p341
      %p343 = scmp.ne.s32.totalorder %s331, %s332
      %p344 = scmp.eq.s32.totalorder %s39, 1
      %p345 = por %p343, %p344
      %p347 = scmp.ne.s32.totalorder %s332, %s346
      %p348 = scmp.eq.s32.totalorder %s39, 0
      %p349 = por %p347, %p348
      %s351 = sadd.s32 %s350, 1
      %p354 = scmp.eq.s32.totalorder %s33, 1
      %p355 = scmp.ne.s32.totalorder %s350, %s352
      %p356 = scmp.eq.s32.totalorder %s33, 0
      %p357 = por %p355, %p356
      %p358 = scmp.ne.s32.totalorder %s350, %s352
      %p359 = scmp.eq.s32.totalorder %s38, 1
      %p360 = por %p358, %p359
      %p361 = scmp.ne.s32.totalorder %s352, %s353
      %p362 = scmp.eq.s32.totalorder %s38, 0
      %p363 = por %p361, %p362
      %p364 = scmp.ne.s32.totalorder %s352, %s353
      %p365 = scmp.eq.s32.totalorder %s39, 1
      %p366 = por %p364, %p365
      %p368 = scmp.ne.s32.totalorder %s353, %s367
      %p369 = scmp.eq.s32.totalorder %s39, 0
      %p370 = por %p368, %p369
      %s371 = ssub.s32 %s33, %s40
      %p372 = scmp.eq.s32.totalorder %s371, 0
      %s374 = sadd.s32 %s373, 1
      %s375 = scalar_select %p372, %s373, %s374
      %p378 = pneg %p372
      %p379 = scmp.eq.s32.totalorder %s33, 1
      %p380 = por %p378, %p379
      %p381 = scmp.ne.s32.totalorder %s373, %s376
      %p382 = scmp.eq.s32.totalorder %s33, 0
      %p383 = por %p381, %p382
      %p384 = scmp.ne.s32.totalorder %s373, %s376
      %p385 = scmp.eq.s32.totalorder %s38, 1
      %p386 = por %p384, %p385
      %p387 = scmp.ne.s32.totalorder %s376, %s377
      %p388 = scmp.eq.s32.totalorder %s38, 0
      %p389 = por %p387, %p388
      %p390 = scmp.ne.s32.totalorder %s376, %s377
      %p391 = scmp.eq.s32.totalorder %s39, 1
      %p392 = por %p390, %p391
      %p394 = scmp.ne.s32.totalorder %s377, %s393
      %p395 = scmp.eq.s32.totalorder %s39, 0
      %p396 = por %p394, %p395
      %p397 = scmp.le.s32.totalorder 1, %s33
      %p398 = scmp.lt.s32.totalorder %s33, 3
      %p399 = pnand %p397, %p398
      %p400 = pneg %p399
      // Predicated region
      $region9: #{tpu_custom_call.1} parent=5 // pred_check
        _
      $region10: #{tpu_custom_call.1} parent=5 // pred_check_branch
        %402 = sbr.rel (%p399) target = $region12
      $region11: #{tpu_custom_call.1} parent=5 // pred_region
        %s403 = ssub.s32 %s33, 1
        // Predicated region
        $region13: #{tpu_custom_call.1} parent=11 // pred_check
          %p404 = pneg %p132
        $region14: #{tpu_custom_call.1} parent=11 // pred_check_branch
          %406 = sbr.rel (%p404) target = $region16
        $region15: #{tpu_custom_call.1} parent=11 // pred_region
          %s408 = ssub.s32 512, 512
          %409 = vsyncadd [#allocation6], %s408
          %s410 = sshll.u32 [#allocation7], 4
          %s411 = int_to_ptr.vmem [resolvable:$true] %s410
          %416 = dma.hbm_to_vmem [thread:$0]  %s3, 512, %s411, [#allocation6], 128, 128, 8
        $region16: #{tpu_custom_call.1} parent=11 // pred_fallthru
          _
        // Predicated region
        $region17: #{tpu_custom_call.1} parent=11 // pred_check
          %p417 = pneg %p153
        $region18: #{tpu_custom_call.1} parent=11 // pred_check_branch
          %419 = sbr.rel (%p417) target = $region20
        $region19: #{tpu_custom_call.1} parent=11 // pred_region
          %s421 = ssub.s32 16, 16
          %422 = vsyncadd [#allocation9], %s421
          %s424 = sshll.u32 [#allocation8], 4
          %s425 = int_to_ptr.vmem [resolvable:$true] %s424
          %427 = dma.hbm_to_vmem [thread:$0]  %s4, 16, %s425, [#allocation9]
        $region20: #{tpu_custom_call.1} parent=11 // pred_fallthru
          _
        // Predicated region
        $region21: #{tpu_custom_call.1} parent=11 // pred_check
          %p428 = pneg %p174
        $region22: #{tpu_custom_call.1} parent=11 // pred_check_branch
          %430 = sbr.rel (%p428) target = $region24
        $region23: #{tpu_custom_call.1} parent=11 // pred_region
          %s432 = ssub.s32 192, 192
          %433 = vsyncadd [#allocation9], %s432
          %s434 = sshll.u32 [#allocation10], 4
          %s435 = int_to_ptr.vmem [resolvable:$true] %s434
          %440 = dma.hbm_to_vmem [thread:$0]  %s5, 192, %s435, [#allocation9], 64, 64, 4
        $region24: #{tpu_custom_call.1} parent=11 // pred_fallthru
          _
        // Predicated region
        $region25: #{tpu_custom_call.1} parent=11 // pred_check
          %p441 = pneg %p195
        $region26: #{tpu_custom_call.1} parent=11 // pred_check_branch
          %443 = sbr.rel (%p441) target = $region28
        $region27: #{tpu_custom_call.1} parent=11 // pred_region
          _
        $region28: #{tpu_custom_call.1} parent=11 // pred_fallthru
          _
        // Predicated region
        $region29: #{tpu_custom_call.1} parent=11 // pred_check
          %p444 = pneg %p216
        $region30: #{tpu_custom_call.1} parent=11 // pred_check_branch
          %446 = sbr.rel (%p444) target = $region32
        $region31: #{tpu_custom_call.1} parent=11 // pred_region
          _
        $region32: #{tpu_custom_call.1} parent=11 // pred_fallthru
          _
        // Predicated region
        $region33: #{tpu_custom_call.1} parent=11 // pred_check
          %p447 = pneg %p237
        $region34: #{tpu_custom_call.1} parent=11 // pred_check_branch
          %449 = sbr.rel (%p447) target = $region36
        $region35: #{tpu_custom_call.1} parent=11 // pred_region
          _
        $region36: #{tpu_custom_call.1} parent=11 // pred_fallthru
          _
        // Predicated region
        $region37: #{tpu_custom_call.1} parent=11 // pred_check
          %p450 = pneg %p258
        $region38: #{tpu_custom_call.1} parent=11 // pred_check_branch
          %452 = sbr.rel (%p450) target = $region40
        $region39: #{tpu_custom_call.1} parent=11 // pred_region
          %s454 = ssub.s32 1536, 1536
          %455 = vsyncadd [#allocation12], %s454
          %s456 = sshll.u32 [#allocation11], 4
          %s457 = int_to_ptr.vmem [resolvable:$true] %s456
          %462 = dma.hbm_to_vmem [thread:$0]  %s9, 1536, %s457, [#allocation12], 128, 128, 8
        $region40: #{tpu_custom_call.1} parent=11 // pred_fallthru
          _
        // Predicated region
        $region41: #{tpu_custom_call.1} parent=11 // pred_check
          %p463 = pneg %p279
        $region42: #{tpu_custom_call.1} parent=11 // pred_check_branch
          %465 = sbr.rel (%p463) target = $region44
        $region43: #{tpu_custom_call.1} parent=11 // pred_region
          %s467 = ssub.s32 48, 48
          %468 = vsyncadd [#allocation12], %s467
          %s469 = sshll.u32 [#allocation13], 4
          %s470 = int_to_ptr.vmem [resolvable:$true] %s469
          %475 = dma.hbm_to_vmem [thread:$0]  %s10, 48, %s470, [#allocation12], 16, 16, 1
        $region44: #{tpu_custom_call.1} parent=11 // pred_fallthru
          _
        // Predicated region
        $region45: #{tpu_custom_call.1} parent=11 // pred_check
          %p476 = pneg %p300
        $region46: #{tpu_custom_call.1} parent=11 // pred_check_branch
          %478 = sbr.rel (%p476) target = $region48
        $region47: #{tpu_custom_call.1} parent=11 // pred_region
          %s480 = ssub.s32 48, 48
          %481 = vsyncadd [#allocation15], %s480
          %s482 = sshll.u32 [#allocation14], 4
          %s483 = int_to_ptr.vmem [resolvable:$true] %s482
          %488 = dma.hbm_to_vmem [thread:$0]  %s11, 48, %s483, [#allocation15], 16, 16, 1
        $region48: #{tpu_custom_call.1} parent=11 // pred_fallthru
          _
        // Predicated region
        $region49: #{tpu_custom_call.1} parent=11 // pred_check
          %p489 = pneg %p321
        $region50: #{tpu_custom_call.1} parent=11 // pred_check_branch
          %491 = sbr.rel (%p489) target = $region52
        $region51: #{tpu_custom_call.1} parent=11 // pred_region
          %s493 = ssub.s32 48, 48
          %494 = vsyncadd [#allocation15], %s493
          %s495 = sshll.u32 [#allocation16], 4
          %s496 = int_to_ptr.vmem [resolvable:$true] %s495
          %501 = dma.hbm_to_vmem [thread:$0]  %s12, 48, %s496, [#allocation15], 16, 16, 1
        $region52: #{tpu_custom_call.1} parent=11 // pred_fallthru
          _
        // Predicated region
        $region53: #{tpu_custom_call.1} parent=11 // pred_check
          %p502 = pneg %p342
        $region54: #{tpu_custom_call.1} parent=11 // pred_check_branch
          %504 = sbr.rel (%p502) target = $region56
        $region55: #{tpu_custom_call.1} parent=11 // pred_region
          _
        $region56: #{tpu_custom_call.1} parent=11 // pred_fallthru
          _
        // Predicated region
        $region57: #{tpu_custom_call.1} parent=11 // pred_check
          %p505 = pneg %p363
        $region58: #{tpu_custom_call.1} parent=11 // pred_check_branch
          %507 = sbr.rel (%p505) target = $region60
        $region59: #{tpu_custom_call.1} parent=11 // pred_region
          _
        $region60: #{tpu_custom_call.1} parent=11 // pred_fallthru
          _
      $region12: #{tpu_custom_call.1} parent=5 // pred_fallthru
        _
      %p508 = scmp.lt.s32.totalorder %s33, 2
      // Predicated region
      $region61: #{tpu_custom_call.1} parent=5 // pred_check
        %p509 = pneg %p508
      $region62: #{tpu_custom_call.1} parent=5 // pred_check_branch
        %511 = sbr.rel (%p509) target = $region64
      $region63: #{tpu_custom_call.1} parent=5 // pred_region
        // Predicated region
        $region65: #{tpu_custom_call.1} parent=63 // pred_check
          %p512 = pneg %p53
        $region66: #{tpu_custom_call.1} parent=63 // pred_check_branch
          %514 = sbr.rel (%p512) target = $region68
        $region67: #{tpu_custom_call.1} parent=63 // pred_region
          %s515 = sand.u32 %s43, 1
          %s516 = scalar_lea.sflag [#allocation3], %s515
          %s517 = sand.u32 %s43, 1
          %s518 = smul.addr %s517, 8
          %s519 = scalar_lea.vmem [#allocation2], %s518
          %s521 = ssub.s32 128, 128
          %522 = vsyncadd %s516, %s521
          %s523 = smul.addr %s33, 128
          %s524 = scalar_lea.hbm %s0, %s523
          %s526 = sshll.u32 %s519, 4
          %s527 = int_to_ptr.vmem [resolvable:$true] %s526
          %529 = dma.hbm_to_vmem [thread:$0]  %s524, 128, %s527, %s516
        $region68: #{tpu_custom_call.1} parent=63 // pred_fallthru
          _
        // Predicated region
        $region69: #{tpu_custom_call.1} parent=63 // pred_check
          %p530 = pneg %p79
        $region70: #{tpu_custom_call.1} parent=63 // pred_check_branch
          %532 = sbr.rel (%p530) target = $region72
        $region71: #{tpu_custom_call.1} parent=63 // pred_region
          %s533 = sand.u32 %s33, 1
          %s534 = scalar_lea.sflag [#allocation6], %s533
          %s535 = sand.u32 %s69, 1
          %s536 = scalar_lea.vmem [#allocation5], %s535
          %s538 = ssub.s32 16, 16
          %539 = vsyncadd %s534, %s538
          %s540 = smul.addr %s33, 16
          %s541 = scalar_lea.hbm %s1, %s540
          %s543 = sshll.u32 %s536, 4
          %s544 = int_to_ptr.vmem [resolvable:$true] %s543
          %546 = dma.hbm_to_vmem [thread:$0]  %s541, 16, %s544, %s534
        $region72: #{tpu_custom_call.1} parent=63 // pred_fallthru
          _
        // Predicated region
        $region73: #{tpu_custom_call.1} parent=63 // pred_check
          %p547 = pneg %p105
        $region74: #{tpu_custom_call.1} parent=63 // pred_check_branch
          %549 = sbr.rel (%p547) target = $region76
        $region75: #{tpu_custom_call.1} parent=63 // pred_region
          %p550 = scmp.lt.s32.totalorder %s33, 1
          %s551 = scalar_select %p550, %s33, 1
          %s552 = smul.addr %s551, 8
          %s553 = scalar_lea.vmem %s2, %s552
        $region76: #{tpu_custom_call.1} parent=63 // pred_fallthru
          _
      $region64: #{tpu_custom_call.1} parent=5 // pred_fallthru
        _
      %p554 = scmp.le.s32.totalorder 1, %s33
      %p555 = scmp.lt.s32.totalorder %s33, 3
      %p556 = pnand %p554, %p555
      %p557 = pneg %p556
      // Predicated region
      $region77: #{tpu_custom_call.1} parent=5 // pred_check
        _
      $region78: #{tpu_custom_call.1} parent=5 // pred_check_branch
        %559 = sbr.rel (%p556) target = $region80
      $region79: #{tpu_custom_call.1} parent=5 // pred_region
        %s560 = ssub.s32 %s33, 1
        %s561 = sand.u32 %s46, 1
        %s562 = scalar_lea.sflag [#allocation3], %s561
        %s563 = sand.u32 %s46, 1
        %s564 = smul.addr %s563, 8
        %s565 = scalar_lea.vmem [#allocation2], %s564
        // Predicated region
        $region81: #{tpu_custom_call.1} parent=79 // pred_check
          %p566 = pneg %p59
        $region82: #{tpu_custom_call.1} parent=79 // pred_check_branch
          %568 = sbr.rel (%p566) target = $region84
        $region83: #{tpu_custom_call.1} parent=79 // pred_region
          %569 = dma.done %s562, 128
        $region84: #{tpu_custom_call.1} parent=79 // pred_fallthru
          _
        %s570 = sand.u32 %s38, 1
        %s571 = scalar_lea.sflag [#allocation6], %s570
        %s572 = sand.u32 %s72, 1
        %s573 = scalar_lea.vmem [#allocation5], %s572
        // Predicated region
        $region85: #{tpu_custom_call.1} parent=79 // pred_check
          %p574 = pneg %p85
        $region86: #{tpu_custom_call.1} parent=79 // pred_check_branch
          %576 = sbr.rel (%p574) target = $region88
        $region87: #{tpu_custom_call.1} parent=79 // pred_region
          %577 = dma.done %s571, 16
        $region88: #{tpu_custom_call.1} parent=79 // pred_fallthru
          _
        // Predicated region
        $region89: #{tpu_custom_call.1} parent=79 // pred_check
          %p578 = pneg %p132
        $region90: #{tpu_custom_call.1} parent=79 // pred_check_branch
          %580 = sbr.rel (%p578) target = $region92
        $region91: #{tpu_custom_call.1} parent=79 // pred_region
          %581 = dma.done [#allocation6], 512
        $region92: #{tpu_custom_call.1} parent=79 // pred_fallthru
          _
        // Predicated region
        $region93: #{tpu_custom_call.1} parent=79 // pred_check
          %p582 = pneg %p153
        $region94: #{tpu_custom_call.1} parent=79 // pred_check_branch
          %584 = sbr.rel (%p582) target = $region96
        $region95: #{tpu_custom_call.1} parent=79 // pred_region
          %585 = dma.done [#allocation9], 16
        $region96: #{tpu_custom_call.1} parent=79 // pred_fallthru
          _
        // Predicated region
        $region97: #{tpu_custom_call.1} parent=79 // pred_check
          %p586 = pneg %p174
        $region98: #{tpu_custom_call.1} parent=79 // pred_check_branch
          %588 = sbr.rel (%p586) target = $region100
        $region99: #{tpu_custom_call.1} parent=79 // pred_region
          %589 = dma.done [#allocation9], 192
        $region100: #{tpu_custom_call.1} parent=79 // pred_fallthru
          _
        // Predicated region
        $region101: #{tpu_custom_call.1} parent=79 // pred_check
          %p590 = pneg %p258
        $region102: #{tpu_custom_call.1} parent=79 // pred_check_branch
          %592 = sbr.rel (%p590) target = $region104
        $region103: #{tpu_custom_call.1} parent=79 // pred_region
          %593 = dma.done [#allocation12], 1536
        $region104: #{tpu_custom_call.1} parent=79 // pred_fallthru
          _
        // Predicated region
        $region105: #{tpu_custom_call.1} parent=79 // pred_check
          %p594 = pneg %p279
        $region106: #{tpu_custom_call.1} parent=79 // pred_check_branch
          %596 = sbr.rel (%p594) target = $region108
        $region107: #{tpu_custom_call.1} parent=79 // pred_region
          %597 = dma.done [#allocation12], 48
        $region108: #{tpu_custom_call.1} parent=79 // pred_fallthru
          _
        // Predicated region
        $region109: #{tpu_custom_call.1} parent=79 // pred_check
          %p598 = pneg %p300
        $region110: #{tpu_custom_call.1} parent=79 // pred_check_branch
          %600 = sbr.rel (%p598) target = $region112
        $region111: #{tpu_custom_call.1} parent=79 // pred_region
          %601 = dma.done [#allocation15], 48
        $region112: #{tpu_custom_call.1} parent=79 // pred_fallthru
          _
        // Predicated region
        $region113: #{tpu_custom_call.1} parent=79 // pred_check
          %p602 = pneg %p321
        $region114: #{tpu_custom_call.1} parent=79 // pred_check_branch
          %604 = sbr.rel (%p602) target = $region116
        $region115: #{tpu_custom_call.1} parent=79 // pred_region
          %605 = dma.done [#allocation15], 48
        $region116: #{tpu_custom_call.1} parent=79 // pred_fallthru
          _
        %s606 = sand.u32 %s46, 1
        %s607 = scalar_lea.sflag [#allocation3], %s606
        %s608 = sand.u32 %s46, 1
        %s609 = smul.addr %s608, 8
        %s610 = scalar_lea.vmem [#allocation2], %s609
        %p611 = pneg %p59
        %p612 = pneg %p56
        %s613 = sand.u32 %s38, 1
        %s614 = scalar_lea.sflag [#allocation6], %s613
        %s615 = sand.u32 %s72, 1
        %s616 = scalar_lea.vmem [#allocation5], %s615
        %p617 = pneg %p85
        %p618 = pneg %p82
        %p619 = scmp.lt.s32.totalorder %s38, 1
        %s620 = scalar_select %p619, %s38, 1
        %s621 = smul.addr %s620, 8
        %s622 = scalar_lea.vmem %s2, %s621
        %p623 = pneg %p111
        %p624 = pneg %p108
        %p625 = pneg %p132
        %p626 = pneg %p129
        %p627 = pneg %p153
        %p628 = pneg %p150
        %p629 = pneg %p174
        %p630 = pneg %p171
        %p631 = pneg %p195
        %p632 = pneg %p192
        %p633 = pneg %p216
        %p634 = pneg %p213
        %p635 = pneg %p237
        %p636 = pneg %p234
        %p637 = pneg %p258
        %p638 = pneg %p255
        %p639 = pneg %p279
        %p640 = pneg %p276
        %p641 = pneg %p300
        %p642 = pneg %p297
        %p643 = pneg %p321
        %p644 = pneg %p318
        %p645 = pneg %p342
        %p646 = pneg %p339
        %p647 = pneg %p363
        %p648 = pneg %p360
        %p649 = pneg %p389
        %p650 = pneg %p386
        %s651 = sand.u32 %s376, 1
        %s652 = scalar_lea.sflag [#allocation4], %s651
        %s653 = sand.u32 %s376, 1
        %s654 = smul.addr %s653, 8
        %s655 = scalar_lea.vmem [#allocation17], %s654
        %p656 = scmp.lt.s32.totalorder %s38, 1
        %s657 = scalar_select %p656, %s38, 1
        %s658 = smul.addr %s657, 8
        %s659 = scalar_lea.vmem %s2, %s658
        %v660 = vld [vmem:[%s565] sm:$0xff]
        %v661 = vld [vmem:[%s573] sm:$0x1]
        %v662 = vld [vmem:[%s659] sm:$0xff]
        %v663 = vld [vmem:[#allocation7] sm:$0xff]
        %v664 = vld [vmem:[#allocation7 + $0x8] sm:$0xff]
        %v665 = vld [vmem:[#allocation7 + $0x10] sm:$0xff]
        %v666 = vld [vmem:[#allocation7 + $0x18] sm:$0xff]
        %v667 = vld [vmem:[#allocation8] sm:$0x1]
        %v669 = vlaneseq
        %v670 = vshrl.u32 %v669, 7
        %v671 = vsub.s32 0, %v670
        %v672 = vrot.slane %v667, %v671
        %vm674 = vcmask 261120
        %v676 = vsel %vm674, %v660, 0
        %678 = vmatprep.subr.mxu0 0.0
        %679 = vmatpush1.msra.mxu0 0.0
        %680 = vmatprep.subr.mxu0 0.0
        %681 = vmatpush1.msra.mxu0 0.0
        %682 = vmatprep.subr.mxu0 0.0
        %683 = vmatpush1.msra.mxu0 0.0
        %684 = vmatprep.subr.mxu0 0.0
        %685 = vmatpush1.msra.mxu0 0.0
        %686 = vmatprep.subr.mxu0 0.0
        %687 = vmatpush1.msra.mxu0 0.0
        %688 = vmatprep.subr.mxu0 0.0
        %689 = vmatpush1.msra.mxu0 0.0
        %690 = vmatprep.subr.mxu0 0.0
        %691 = vmatpush1.msra.mxu0 0.0
        %692 = vmatprep.subr.mxu0 0.0
        %693 = vmatpush1.msra.mxu0 0.0
        %694 = vmatprep.subr.mxu0 0.0
        %695 = vmatpush1.msra.mxu0 0.0
        %696 = vmatprep.subr.mxu0 0.0
        %697 = vmatpush1.msra.mxu0 0.0
        %698 = vmatprep.subr.mxu0 0.0
        %699 = vmatpush1.msra.mxu0 0.0
        %700 = vmatprep.subr.mxu0 0.0
        %701 = vmatpush1.msra.mxu0 0.0
        %702 = vmatprep.subr.mxu0 0.0
        %703 = vmatpush1.msra.mxu0 %v666
        %704 = vmatprep.subr.mxu0 0.0
        %705 = vmatpush1.msra.mxu0 %v665
        %706 = vmatprep.subr.mxu0 0.0
        %707 = vmatpush1.msra.mxu0 %v664
        %708 = vmatprep.subr.mxu0 0.0
        %709 = vmatpush1.msra.mxu0 %v663
        %710 = vmatprep.subr.mxu0 0.0
        %711 = vmatpush2.msra.mxu0 0.0
        %712 = vmatprep.subr.mxu0 0.0
        %713 = vmatpush2.msra.mxu0 0.0
        %714 = vmatprep.subr.mxu0 0.0
        %715 = vmatpush2.msra.mxu0 0.0
        %716 = vmatprep.subr.mxu0 0.0
        %717 = vmatpush2.msra.mxu0 0.0
        %718 = vmatprep.subr.mxu0 0.0
        %719 = vmatpush2.msra.mxu0 0.0
        %720 = vmatprep.subr.mxu0 0.0
        %721 = vmatpush2.msra.mxu0 0.0
        %722 = vmatprep.subr.mxu0 0.0
        %723 = vmatpush2.msra.mxu0 0.0
        %724 = vmatprep.subr.mxu0 0.0
        %725 = vmatpush2.msra.mxu0 0.0
        %726 = vmatprep.subr.mxu0 0.0
        %727 = vmatpush2.msra.mxu0 0.0
        %728 = vmatprep.subr.mxu0 0.0
        %729 = vmatpush2.msra.mxu0 0.0
        %730 = vmatprep.subr.mxu0 0.0
        %731 = vmatpush2.msra.mxu0 0.0
        %732 = vmatprep.subr.mxu0 0.0
        %733 = vmatpush2.msra.mxu0 0.0
        %734 = vmatprep.subr.mxu0 0.0
        %735 = vmatpush2.msra.mxu0 0.0
        %736 = vmatprep.subr.mxu0 0.0
        %737 = vmatpush2.msra.mxu0 0.0
        %738 = vmatprep.subr.mxu0 0.0
        %739 = vmatpush2.msra.mxu0 0.0
        %740 = vmatprep.subr.mxu0 0.0
        %741 = vmatpush2.msra.mxu0 0.0
        %742 = vmatprep.mubr.f32.mxu0 0.0
        %743 = vmatmul.mubr.f32.gmra.mxu0 %v676
        %v744 = vpop.f32.mrf.mxu0
        %v745 = vadd.f32 %v672, %v744
        %v746 = vpop.f32.mrf.mxu0
        %747 = vdwg.mxu0
        %v749 = vlaneseq
        %v750 = vshrl.u32 %v749, 7
        %v751 = vsub.s32 0, %v750
        %v752 = vrot.slane %v661, %v751
        %v754 = vadd.f32 %v745, %v752
        %v755 = vlaneseq
        %v756 = vshrl.u32 %v755, 7
        %v757 = vld [vmem:[#allocation10] sm:$0x7]
        %759 = vset.pattern.permute.xlu0 0
        %760 = vperm.xlu0 %759, %v662
        %v761 = vpop.permute.xlu0 %760
        %v763 = vmul.f32 %v754, %v761
        %v764 = vlaneseq
        %v765 = vshrl.u32 %v764, 7
        %v766 = vsub.s32 1, %v765
        %v767 = vrot.slane %v757, %v766
        %v768 = vmul.f32 %v763, %v767
        %v769 = vrot.slane %v763, 7
        %v770 = vadd.s32 %v756, 4294967295
        %vm771 = vcmp.ge.s32.totalorder %v770, 0
        %vm772 = vcmp.lt.s32.totalorder %v770, 8
        %vm773 = vmand %vm771, %vm772
        %v774 = vsel %vm773, 1, 0
        %vm775 = vcmp.eq.s32.totalorder %v774, 1
        %v776 = vsel %vm775, %v769, 0.0
        %v777 = vlaneseq
        %v778 = vshrl.u32 %v777, 7
        %v779 = vsub.s32 0, %v778
        %v780 = vrot.slane %v757, %v779
        %v781 = vmul.f32 %v776, %v780
        %v782 = vadd.f32 %v768, %v781
        %v783 = vrot.slane %v763, 1
        %v784 = vadd.s32 %v756, 1
        %vm785 = vcmp.ge.s32.totalorder %v784, 0
        %vm786 = vcmp.lt.s32.totalorder %v784, 8
        %vm787 = vmand %vm785, %vm786
        %v788 = vsel %vm787, 1, 0
        %vm789 = vcmp.eq.s32.totalorder %v788, 1
        %v790 = vsel %vm789, %v783, 0.0
        %v791 = vlaneseq
        %v792 = vshrl.u32 %v791, 7
        %v793 = vsub.s32 2, %v792
        %v794 = vrot.slane %v757, %v793
        %v795 = vmul.f32 %v790, %v794
        %v796 = vadd.f32 %v782, %v795
        %v797 = vld [vmem:[%s6] sm:$0x1]
        %v799 = vlaneseq
        %v800 = vshrl.u32 %v799, 7
        %v801 = vsub.s32 0, %v800
        %v802 = vrot.slane %v797, %v801
        %v804 = vadd.f32 %v796, %v802
        %v805 = vld [vmem:[%s7] sm:$0x1]
        %v806 = vld [vmem:[%s8] sm:$0x1]
        %v807 = vsel %vm674, %v804, 0.0
        %808 = vadd.xlane.f32.xlu0 %v807
        %v809 = vpop.xlane.xlu0 %808
        %v810 = vrcp.pop 32.0
        %v811 = vmul.f32 %v809, %v810
        %v812 = vsub.f32 %v804, %v811
        %v813 = vmul.f32 %v812, %v812
        %v814 = vsel %vm674, %v813, 0.0
        %815 = vadd.xlane.f32.xlu0 %v814
        %v816 = vpop.xlane.xlu0 %815
        %v817 = vmul.f32 %v816, %v810
        %v818 = vadd.f32 %v817, 1e-05
        %v819 = vrsqrt.pop %v818
        %v820 = vmul.f32 %v812, %v819
        %v822 = vlaneseq
        %v823 = vshrl.u32 %v822, 7
        %v824 = vsub.s32 0, %v823
        %v825 = vrot.slane %v805, %v824
        %v827 = vmul.f32 %v820, %v825
        %v829 = vlaneseq
        %v830 = vshrl.u32 %v829, 7
        %v831 = vsub.s32 0, %v830
        %v832 = vrot.slane %v806, %v831
        %v834 = vadd.f32 %v827, %v832
        %v835 = vmul.f32 %v834, 0.5
        %v836 = vmul.f32 %v834, 0.70710677
        %vm837 = vcmp.ge.f32.partialorder %v836, 0.0
        %v838 = vsel %vm837, 1.0, -1.0
        %v839 = vand.u32 2147483647, %v836
        %v840 = vmul.f32 %v839, 0.3275911
        %v841 = vadd.f32 %v840, 1.0
        %v842 = vrcp.pop %v841
        %v843 = vmul.f32 1.0, %v842
        %v844 = vmul.f32 %v843, 1.0614054
        %v845 = vsub.f32 %v844, 1.4531521
        %v846 = vmul.f32 %v845, %v843
        %v847 = vadd.f32 %v846, 1.4214138
        %v848 = vmul.f32 %v847, %v843
        %v849 = vsub.f32 %v848, 0.28449672
        %v850 = vmul.f32 %v849, %v843
        %v851 = vadd.f32 %v850, 0.2548296
        %v852 = vmul.f32 %v851, %v843
        %v853 = vsub.f32 0.0, %v839
        %v854 = vmul.f32 %v853, %v839
        %v855 = vmul.f32 %v854, 1.442695
        %v856 = vpow.pop %v855
        %v857 = vmul.f32 %v852, %v856
        %v858 = vsub.f32 1.0, %v857
        %v859 = vmul.f32 %v838, %v858
        %v860 = vadd.f32 %v859, 1.0
        %v861 = vmul.f32 %v835, %v860
        %v862 = vld [vmem:[#allocation11] sm:$0xff]
        %v863 = vld [vmem:[#allocation11 + $0x8] sm:$0xff]
        %v864 = vld [vmem:[#allocation11 + $0x10] sm:$0xff]
        %v865 = vld [vmem:[#allocation11 + $0x18] sm:$0xff]
        %v866 = vld [vmem:[#allocation13] sm:$0x1]
        %v868 = vlaneseq
        %v869 = vshrl.u32 %v868, 7
        %v870 = vsub.s32 0, %v869
        %v871 = vrot.slane %v866, %v870
        %v874 = vsel %vm674, %v861, 0
        %876 = vmatprep.subr.mxu0 0.0
        %877 = vmatpush1.msra.mxu0 0.0
        %878 = vmatprep.subr.mxu0 0.0
        %879 = vmatpush1.msra.mxu0 0.0
        %880 = vmatprep.subr.mxu0 0.0
        %881 = vmatpush1.msra.mxu0 0.0
        %882 = vmatprep.subr.mxu0 0.0
        %883 = vmatpush1.msra.mxu0 0.0
        %884 = vmatprep.subr.mxu0 0.0
        %885 = vmatpush1.msra.mxu0 0.0
        %886 = vmatprep.subr.mxu0 0.0
        %887 = vmatpush1.msra.mxu0 0.0
        %888 = vmatprep.subr.mxu0 0.0
        %889 = vmatpush1.msra.mxu0 0.0
        %890 = vmatprep.subr.mxu0 0.0
        %891 = vmatpush1.msra.mxu0 0.0
        %892 = vmatprep.subr.mxu0 0.0
        %893 = vmatpush1.msra.mxu0 0.0
        %894 = vmatprep.subr.mxu0 0.0
        %895 = vmatpush1.msra.mxu0 0.0
        %896 = vmatprep.subr.mxu0 0.0
        %897 = vmatpush1.msra.mxu0 0.0
        %898 = vmatprep.subr.mxu0 0.0
        %899 = vmatpush1.msra.mxu0 0.0
        %900 = vmatprep.subr.mxu0 0.0
        %901 = vmatpush1.msra.mxu0 %v865
        %902 = vmatprep.subr.mxu0 0.0
        %903 = vmatpush1.msra.mxu0 %v864
        %904 = vmatprep.subr.mxu0 0.0
        %905 = vmatpush1.msra.mxu0 %v863
        %906 = vmatprep.subr.mxu0 0.0
        %907 = vmatpush1.msra.mxu0 %v862
        %908 = vmatprep.subr.mxu0 0.0
        %909 = vmatpush2.msra.mxu0 0.0
        %910 = vmatprep.subr.mxu0 0.0
        %911 = vmatpush2.msra.mxu0 0.0
        %912 = vmatprep.subr.mxu0 0.0
        %913 = vmatpush2.msra.mxu0 0.0
        %914 = vmatprep.subr.mxu0 0.0
        %915 = vmatpush2.msra.mxu0 0.0
        %916 = vmatprep.subr.mxu0 0.0
        %917 = vmatpush2.msra.mxu0 0.0
        %918 = vmatprep.subr.mxu0 0.0
        %919 = vmatpush2.msra.mxu0 0.0
        %920 = vmatprep.subr.mxu0 0.0
        %921 = vmatpush2.msra.mxu0 0.0
        %922 = vmatprep.subr.mxu0 0.0
        %923 = vmatpush2.msra.mxu0 0.0
        %924 = vmatprep.subr.mxu0 0.0
        %925 = vmatpush2.msra.mxu0 0.0
        %926 = vmatprep.subr.mxu0 0.0
        %927 = vmatpush2.msra.mxu0 0.0
        %928 = vmatprep.subr.mxu0 0.0
        %929 = vmatpush2.msra.mxu0 0.0
        %930 = vmatprep.subr.mxu0 0.0
        %931 = vmatpush2.msra.mxu0 0.0
        %932 = vmatprep.subr.mxu0 0.0
        %933 = vmatpush2.msra.mxu0 0.0
        %934 = vmatprep.subr.mxu0 0.0
        %935 = vmatpush2.msra.mxu0 0.0
        %936 = vmatprep.subr.mxu0 0.0
        %937 = vmatpush2.msra.mxu0 0.0
        %938 = vmatprep.subr.mxu0 0.0
        %939 = vmatpush2.msra.mxu0 0.0
        %940 = vmatprep.mubr.f32.mxu0 0.0
        %941 = vmatmul.mubr.f32.gmra.mxu0 %v874
        %v942 = vpop.f32.mrf.mxu0
        %v943 = vadd.f32 %v871, %v942
        %v944 = vpop.f32.mrf.mxu0
        %945 = vdwg.mxu0
        %v946 = vld [vmem:[#allocation14] sm:$0x1]
        %v947 = vld [vmem:[#allocation16] sm:$0x1]
        %v948 = vsel %vm674, %v943, 0.0
        %949 = vadd.xlane.f32.xlu0 %v948
        %v950 = vpop.xlane.xlu0 %949
        %v951 = vmul.f32 %v950, %v810
        %v952 = vsub.f32 %v943, %v951
        %v953 = vmul.f32 %v952, %v952
        %v954 = vsel %vm674, %v953, 0.0
        %955 = vadd.xlane.f32.xlu0 %v954
        %v956 = vpop.xlane.xlu0 %955
        %v957 = vmul.f32 %v956, %v810
        %v958 = vadd.f32 %v957, 1e-05
        %v959 = vrsqrt.pop %v958
        %v960 = vmul.f32 %v952, %v959
        %v962 = vlaneseq
        %v963 = vshrl.u32 %v962, 7
        %v964 = vsub.s32 0, %v963
        %v965 = vrot.slane %v946, %v964
        %v967 = vmul.f32 %v960, %v965
        %v969 = vlaneseq
        %v970 = vshrl.u32 %v969, 7
        %v971 = vsub.s32 0, %v970
        %v972 = vrot.slane %v947, %v971
        %v974 = vadd.f32 %v967, %v972
        %v975 = vmul.f32 %v974, 0.5
        %v976 = vmul.f32 %v974, 0.70710677
        %vm977 = vcmp.ge.f32.partialorder %v976, 0.0
        %v978 = vsel %vm977, 1.0, -1.0
        %v979 = vand.u32 2147483647, %v976
        %v980 = vmul.f32 %v979, 0.3275911
        %v981 = vadd.f32 %v980, 1.0
        %v982 = vrcp.pop %v981
        %v983 = vmul.f32 1.0, %v982
        %v984 = vmul.f32 %v983, 1.0614054
        %v985 = vsub.f32 %v984, 1.4531521
        %v986 = vmul.f32 %v985, %v983
        %v987 = vadd.f32 %v986, 1.4214138
        %v988 = vmul.f32 %v987, %v983
        %v989 = vsub.f32 %v988, 0.28449672
        %v990 = vmul.f32 %v989, %v983
        %v991 = vadd.f32 %v990, 0.2548296
        %v992 = vmul.f32 %v991, %v983
        %v993 = vsub.f32 0.0, %v979
        %v994 = vmul.f32 %v993, %v979
        %v995 = vmul.f32 %v994, 1.442695
        %v996 = vpow.pop %v995
        %v997 = vmul.f32 %v992, %v996
        %v998 = vsub.f32 1.0, %v997
        %v999 = vmul.f32 %v978, %v998
        %v1000 = vadd.f32 %v999, 1.0
        %v1001 = vmul.f32 %v975, %v1000
        %v1002 = vadd.f32 %v754, %v1001
        %s1003 = scalar_lea.vmem [#allocation10], 4
        %v1004 = vld [vmem:[%s1003] sm:$0x7]
        %v1005 = vmul.f32 %v1002, %v761
        %v1006 = vlaneseq
        %v1007 = vshrl.u32 %v1006, 7
        %v1008 = vsub.s32 1, %v1007
        %v1009 = vrot.slane %v1004, %v1008
        %v1010 = vmul.f32 %v1005, %v1009
        %v1011 = vrot.slane %v1005, 5
        %v1012 = vadd.s32 %v756, 4294967293
        %vm1013 = vcmp.ge.s32.totalorder %v1012, 0
        %vm1014 = vcmp.lt.s32.totalorder %v1012, 8
        %vm1015 = vmand %vm1013, %vm1014
        %v1016 = vsel %vm1015, 1, 0
        %vm1017 = vcmp.eq.s32.totalorder %v1016, 1
        %v1018 = vsel %vm1017, %v1011, 0.0
        %v1019 = vlaneseq
        %v1020 = vshrl.u32 %v1019, 7
        %v1021 = vsub.s32 0, %v1020
        %v1022 = vrot.slane %v1004, %v1021
        %v1023 = vmul.f32 %v1018, %v1022
        %v1024 = vadd.f32 %v1010, %v1023
        %v1025 = vrot.slane %v1005, 3
        %v1026 = vadd.s32 %v756, 3
        %vm1027 = vcmp.ge.s32.totalorder %v1026, 0
        %vm1028 = vcmp.lt.s32.totalorder %v1026, 8
        %vm1029 = vmand %vm1027, %vm1028
        %v1030 = vsel %vm1029, 1, 0
        %vm1031 = vcmp.eq.s32.totalorder %v1030, 1
        %v1032 = vsel %vm1031, %v1025, 0.0
        %v1033 = vlaneseq
        %v1034 = vshrl.u32 %v1033, 7
        %v1035 = vsub.s32 2, %v1034
        %v1036 = vrot.slane %v1004, %v1035
        %v1037 = vmul.f32 %v1032, %v1036
        %v1038 = vadd.f32 %v1024, %v1037
        %s1039 = scalar_lea.vmem %s6, 1
        %v1040 = vld [vmem:[%s1039] sm:$0x1]
        %v1042 = vlaneseq
        %v1043 = vshrl.u32 %v1042, 7
        %v1044 = vsub.s32 0, %v1043
        %v1045 = vrot.slane %v1040, %v1044
        %v1047 = vadd.f32 %v1038, %v1045
        %s1048 = scalar_lea.vmem %s7, 1
        %v1049 = vld [vmem:[%s1048] sm:$0x1]
        %s1050 = scalar_lea.vmem %s8, 1
        %v1051 = vld [vmem:[%s1050] sm:$0x1]
        %v1052 = vsel %vm674, %v1047, 0.0
        %1053 = vadd.xlane.f32.xlu0 %v1052
        %v1054 = vpop.xlane.xlu0 %1053
        %v1055 = vmul.f32 %v1054, %v810
        %v1056 = vsub.f32 %v1047, %v1055
        %v1057 = vmul.f32 %v1056, %v1056
        %v1058 = vsel %vm674, %v1057, 0.0
        %1059 = vadd.xlane.f32.xlu0 %v1058
        %v1060 = vpop.xlane.xlu0 %1059
        %v1061 = vmul.f32 %v1060, %v810
        %v1062 = vadd.f32 %v1061, 1e-05
        %v1063 = vrsqrt.pop %v1062
        %v1064 = vmul.f32 %v1056, %v1063
        %v1066 = vlaneseq
        %v1067 = vshrl.u32 %v1066, 7
        %v1068 = vsub.s32 0, %v1067
        %v1069 = vrot.slane %v1049, %v1068
        %v1071 = vmul.f32 %v1064, %v1069
        %v1073 = vlaneseq
        %v1074 = vshrl.u32 %v1073, 7
        %v1075 = vsub.s32 0, %v1074
        %v1076 = vrot.slane %v1051, %v1075
        %v1078 = vadd.f32 %v1071, %v1076
        %v1079 = vmul.f32 %v1078, 0.5
        %v1080 = vmul.f32 %v1078, 0.70710677
        %vm1081 = vcmp.ge.f32.partialorder %v1080, 0.0
        %v1082 = vsel %vm1081, 1.0, -1.0
        %v1083 = vand.u32 2147483647, %v1080
        %v1084 = vmul.f32 %v1083, 0.3275911
        %v1085 = vadd.f32 %v1084, 1.0
        %v1086 = vrcp.pop %v1085
        %v1087 = vmul.f32 1.0, %v1086
        %v1088 = vmul.f32 %v1087, 1.0614054
        %v1089 = vsub.f32 %v1088, 1.4531521
        %v1090 = vmul.f32 %v1089, %v1087
        %v1091 = vadd.f32 %v1090, 1.4214138
        %v1092 = vmul.f32 %v1091, %v1087
        %v1093 = vsub.f32 %v1092, 0.28449672
        %v1094 = vmul.f32 %v1093, %v1087
        %v1095 = vadd.f32 %v1094, 0.2548296
        %v1096 = vmul.f32 %v1095, %v1087
        %v1097 = vsub.f32 0.0, %v1083
        %v1098 = vmul.f32 %v1097, %v1083
        %v1099 = vmul.f32 %v1098, 1.442695
        %v1100 = vpow.pop %v1099
        %v1101 = vmul.f32 %v1096, %v1100
        %v1102 = vsub.f32 1.0, %v1101
        %v1103 = vmul.f32 %v1082, %v1102
        %v1104 = vadd.f32 %v1103, 1.0
        %v1105 = vmul.f32 %v1079, %v1104
        %s1106 = scalar_lea.vmem [#allocation11], 32
        %v1107 = vld [vmem:[%s1106] sm:$0xff]
        %v1108 = vld [vmem:[%s1106 + $0x8] sm:$0xff]
        %v1109 = vld [vmem:[%s1106 + $0x10] sm:$0xff]
        %v1110 = vld [vmem:[%s1106 + $0x18] sm:$0xff]
        %s1111 = scalar_lea.vmem [#allocation13], 1
        %v1112 = vld [vmem:[%s1111] sm:$0x1]
        %v1114 = vlaneseq
        %v1115 = vshrl.u32 %v1114, 7
        %v1116 = vsub.s32 0, %v1115
        %v1117 = vrot.slane %v1112, %v1116
        %v1120 = vsel %vm674, %v1105, 0
        %1122 = vmatprep.subr.mxu0 0.0
        %1123 = vmatpush1.msra.mxu0 0.0
        %1124 = vmatprep.subr.mxu0 0.0
        %1125 = vmatpush1.msra.mxu0 0.0
        %1126 = vmatprep.subr.mxu0 0.0
        %1127 = vmatpush1.msra.mxu0 0.0
        %1128 = vmatprep.subr.mxu0 0.0
        %1129 = vmatpush1.msra.mxu0 0.0
        %1130 = vmatprep.subr.mxu0 0.0
        %1131 = vmatpush1.msra.mxu0 0.0
        %1132 = vmatprep.subr.mxu0 0.0
        %1133 = vmatpush1.msra.mxu0 0.0
        %1134 = vmatprep.subr.mxu0 0.0
        %1135 = vmatpush1.msra.mxu0 0.0
        %1136 = vmatprep.subr.mxu0 0.0
        %1137 = vmatpush1.msra.mxu0 0.0
        %1138 = vmatprep.subr.mxu0 0.0
        %1139 = vmatpush1.msra.mxu0 0.0
        %1140 = vmatprep.subr.mxu0 0.0
        %1141 = vmatpush1.msra.mxu0 0.0
        %1142 = vmatprep.subr.mxu0 0.0
        %1143 = vmatpush1.msra.mxu0 0.0
        %1144 = vmatprep.subr.mxu0 0.0
        %1145 = vmatpush1.msra.mxu0 0.0
        %1146 = vmatprep.subr.mxu0 0.0
        %1147 = vmatpush1.msra.mxu0 %v1110
        %1148 = vmatprep.subr.mxu0 0.0
        %1149 = vmatpush1.msra.mxu0 %v1109
        %1150 = vmatprep.subr.mxu0 0.0
        %1151 = vmatpush1.msra.mxu0 %v1108
        %1152 = vmatprep.subr.mxu0 0.0
        %1153 = vmatpush1.msra.mxu0 %v1107
        %1154 = vmatprep.subr.mxu0 0.0
        %1155 = vmatpush2.msra.mxu0 0.0
        %1156 = vmatprep.subr.mxu0 0.0
        %1157 = vmatpush2.msra.mxu0 0.0
        %1158 = vmatprep.subr.mxu0 0.0
        %1159 = vmatpush2.msra.mxu0 0.0
        %1160 = vmatprep.subr.mxu0 0.0
        %1161 = vmatpush2.msra.mxu0 0.0
        %1162 = vmatprep.subr.mxu0 0.0
        %1163 = vmatpush2.msra.mxu0 0.0
        %1164 = vmatprep.subr.mxu0 0.0
        %1165 = vmatpush2.msra.mxu0 0.0
        %1166 = vmatprep.subr.mxu0 0.0
        %1167 = vmatpush2.msra.mxu0 0.0
        %1168 = vmatprep.subr.mxu0 0.0
        %1169 = vmatpush2.msra.mxu0 0.0
        %1170 = vmatprep.subr.mxu0 0.0
        %1171 = vmatpush2.msra.mxu0 0.0
        %1172 = vmatprep.subr.mxu0 0.0
        %1173 = vmatpush2.msra.mxu0 0.0
        %1174 = vmatprep.subr.mxu0 0.0
        %1175 = vmatpush2.msra.mxu0 0.0
        %1176 = vmatprep.subr.mxu0 0.0
        %1177 = vmatpush2.msra.mxu0 0.0
        %1178 = vmatprep.subr.mxu0 0.0
        %1179 = vmatpush2.msra.mxu0 0.0
        %1180 = vmatprep.subr.mxu0 0.0
        %1181 = vmatpush2.msra.mxu0 0.0
        %1182 = vmatprep.subr.mxu0 0.0
        %1183 = vmatpush2.msra.mxu0 0.0
        %1184 = vmatprep.subr.mxu0 0.0
        %1185 = vmatpush2.msra.mxu0 0.0
        %1186 = vmatprep.mubr.f32.mxu0 0.0
        %1187 = vmatmul.mubr.f32.gmra.mxu0 %v1120
        %v1188 = vpop.f32.mrf.mxu0
        %v1189 = vadd.f32 %v1117, %v1188
        %v1190 = vpop.f32.mrf.mxu0
        %1191 = vdwg.mxu0
        %s1192 = scalar_lea.vmem [#allocation14], 1
        %v1193 = vld [vmem:[%s1192] sm:$0x1]
        %s1194 = scalar_lea.vmem [#allocation16], 1
        %v1195 = vld [vmem:[%s1194] sm:$0x1]
        %v1196 = vsel %vm674, %v1189, 0.0
        %1197 = vadd.xlane.f32.xlu0 %v1196
        %v1198 = vpop.xlane.xlu0 %1197
        %v1199 = vmul.f32 %v1198, %v810
        %v1200 = vsub.f32 %v1189, %v1199
        %v1201 = vmul.f32 %v1200, %v1200
        %v1202 = vsel %vm674, %v1201, 0.0
        %1203 = vadd.xlane.f32.xlu0 %v1202
        %v1204 = vpop.xlane.xlu0 %1203
        %v1205 = vmul.f32 %v1204, %v810
        %v1206 = vadd.f32 %v1205, 1e-05
        %v1207 = vrsqrt.pop %v1206
        %v1208 = vmul.f32 %v1200, %v1207
        %v1210 = vlaneseq
        %v1211 = vshrl.u32 %v1210, 7
        %v1212 = vsub.s32 0, %v1211
        %v1213 = vrot.slane %v1193, %v1212
        %v1215 = vmul.f32 %v1208, %v1213
        %v1217 = vlaneseq
        %v1218 = vshrl.u32 %v1217, 7
        %v1219 = vsub.s32 0, %v1218
        %v1220 = vrot.slane %v1195, %v1219
        %v1222 = vadd.f32 %v1215, %v1220
        %v1223 = vmul.f32 %v1222, 0.5
        %v1224 = vmul.f32 %v1222, 0.70710677
        %vm1225 = vcmp.ge.f32.partialorder %v1224, 0.0
        %v1226 = vsel %vm1225, 1.0, -1.0
        %v1227 = vand.u32 2147483647, %v1224
        %v1228 = vmul.f32 %v1227, 0.3275911
        %v1229 = vadd.f32 %v1228, 1.0
        %v1230 = vrcp.pop %v1229
        %v1231 = vmul.f32 1.0, %v1230
        %v1232 = vmul.f32 %v1231, 1.0614054
        %v1233 = vsub.f32 %v1232, 1.4531521
        %v1234 = vmul.f32 %v1233, %v1231
        %v1235 = vadd.f32 %v1234, 1.4214138
        %v1236 = vmul.f32 %v1235, %v1231
        %v1237 = vsub.f32 %v1236, 0.28449672
        %v1238 = vmul.f32 %v1237, %v1231
        %v1239 = vadd.f32 %v1238, 0.2548296
        %v1240 = vmul.f32 %v1239, %v1231
        %v1241 = vsub.f32 0.0, %v1227
        %v1242 = vmul.f32 %v1241, %v1227
        %v1243 = vmul.f32 %v1242, 1.442695
        %v1244 = vpow.pop %v1243
        %v1245 = vmul.f32 %v1240, %v1244
        %v1246 = vsub.f32 1.0, %v1245
        %v1247 = vmul.f32 %v1226, %v1246
        %v1248 = vadd.f32 %v1247, 1.0
        %v1249 = vmul.f32 %v1223, %v1248
        %v1250 = vadd.f32 %v1002, %v1249
        %s1251 = scalar_lea.vmem [#allocation10], 8
        %v1252 = vld [vmem:[%s1251] sm:$0x7]
        %v1253 = vmul.f32 %v1250, %v761
        %v1254 = vlaneseq
        %v1255 = vshrl.u32 %v1254, 7
        %v1256 = vsub.s32 1, %v1255
        %v1257 = vrot.slane %v1252, %v1256
        %v1258 = vmul.f32 %v1253, %v1257
        %v1259 = vrot.slane %v1253, 7
        %v1260 = vadd.s32 %v756, 4294967287
        %vm1261 = vcmp.ge.s32.totalorder %v1260, 0
        %vm1262 = vcmp.lt.s32.totalorder %v1260, 8
        %vm1263 = vmand %vm1261, %vm1262
        %v1264 = vsel %vm1263, 1, 0
        %vm1265 = vcmp.eq.s32.totalorder %v1264, 1
        %v1266 = vsel %vm1265, %v1259, 0.0
        %v1267 = vlaneseq
        %v1268 = vshrl.u32 %v1267, 7
        %v1269 = vsub.s32 0, %v1268
        %v1270 = vrot.slane %v1252, %v1269
        %v1271 = vmul.f32 %v1266, %v1270
        %v1272 = vadd.f32 %v1258, %v1271
        %v1273 = vrot.slane %v1253, 1
        %v1274 = vadd.s32 %v756, 9
        %vm1275 = vcmp.ge.s32.totalorder %v1274, 0
        %vm1276 = vcmp.lt.s32.totalorder %v1274, 8
        %vm1277 = vmand %vm1275, %vm1276
        %v1278 = vsel %vm1277, 1, 0
        %vm1279 = vcmp.eq.s32.totalorder %v1278, 1
        %v1280 = vsel %vm1279, %v1273, 0.0
        %v1281 = vlaneseq
        %v1282 = vshrl.u32 %v1281, 7
        %v1283 = vsub.s32 2, %v1282
        %v1284 = vrot.slane %v1252, %v1283
        %v1285 = vmul.f32 %v1280, %v1284
        %v1286 = vadd.f32 %v1272, %v1285
        %s1287 = scalar_lea.vmem %s6, 2
        %v1288 = vld [vmem:[%s1287] sm:$0x1]
        %v1290 = vlaneseq
        %v1291 = vshrl.u32 %v1290, 7
        %v1292 = vsub.s32 0, %v1291
        %v1293 = vrot.slane %v1288, %v1292
        %v1295 = vadd.f32 %v1286, %v1293
        %s1296 = scalar_lea.vmem %s7, 2
        %v1297 = vld [vmem:[%s1296] sm:$0x1]
        %s1298 = scalar_lea.vmem %s8, 2
        %v1299 = vld [vmem:[%s1298] sm:$0x1]
        %v1300 = vsel %vm674, %v1295, 0.0
        %1301 = vadd.xlane.f32.xlu0 %v1300
        %v1302 = vpop.xlane.xlu0 %1301
        %v1303 = vmul.f32 %v1302, %v810
        %v1304 = vsub.f32 %v1295, %v1303
        %v1305 = vmul.f32 %v1304, %v1304
        %v1306 = vsel %vm674, %v1305, 0.0
        %1307 = vadd.xlane.f32.xlu0 %v1306
        %v1308 = vpop.xlane.xlu0 %1307
        %v1309 = vmul.f32 %v1308, %v810
        %v1310 = vadd.f32 %v1309, 1e-05
        %v1311 = vrsqrt.pop %v1310
        %v1312 = vmul.f32 %v1304, %v1311
        %v1314 = vlaneseq
        %v1315 = vshrl.u32 %v1314, 7
        %v1316 = vsub.s32 0, %v1315
        %v1317 = vrot.slane %v1297, %v1316
        %v1319 = vmul.f32 %v1312, %v1317
        %v1321 = vlaneseq
        %v1322 = vshrl.u32 %v1321, 7
        %v1323 = vsub.s32 0, %v1322
        %v1324 = vrot.slane %v1299, %v1323
        %v1326 = vadd.f32 %v1319, %v1324
        %v1327 = vmul.f32 %v1326, 0.5
        %v1328 = vmul.f32 %v1326, 0.70710677
        %vm1329 = vcmp.ge.f32.partialorder %v1328, 0.0
        %v1330 = vsel %vm1329, 1.0, -1.0
        %v1331 = vand.u32 2147483647, %v1328
        %v1332 = vmul.f32 %v1331, 0.3275911
        %v1333 = vadd.f32 %v1332, 1.0
        %v1334 = vrcp.pop %v1333
        %v1335 = vmul.f32 1.0, %v1334
        %v1336 = vmul.f32 %v1335, 1.0614054
        %v1337 = vsub.f32 %v1336, 1.4531521
        %v1338 = vmul.f32 %v1337, %v1335
        %v1339 = vadd.f32 %v1338, 1.4214138
        %v1340 = vmul.f32 %v1339, %v1335
        %v1341 = vsub.f32 %v1340, 0.28449672
        %v1342 = vmul.f32 %v1341, %v1335
        %v1343 = vadd.f32 %v1342, 0.2548296
        %v1344 = vmul.f32 %v1343, %v1335
        %v1345 = vsub.f32 0.0, %v1331
        %v1346 = vmul.f32 %v1345, %v1331
        %v1347 = vmul.f32 %v1346, 1.442695
        %v1348 = vpow.pop %v1347
        %v1349 = vmul.f32 %v1344, %v1348
        %v1350 = vsub.f32 1.0, %v1349
        %v1351 = vmul.f32 %v1330, %v1350
        %v1352 = vadd.f32 %v1351, 1.0
        %v1353 = vmul.f32 %v1327, %v1352
        %s1354 = scalar_lea.vmem [#allocation11], 64
        %v1355 = vld [vmem:[%s1354] sm:$0xff]
        %v1356 = vld [vmem:[%s1354 + $0x8] sm:$0xff]
        %v1357 = vld [vmem:[%s1354 + $0x10] sm:$0xff]
        %v1358 = vld [vmem:[%s1354 + $0x18] sm:$0xff]
        %s1359 = scalar_lea.vmem [#allocation13], 2
        %v1360 = vld [vmem:[%s1359] sm:$0x1]
        %v1362 = vlaneseq
        %v1363 = vshrl.u32 %v1362, 7
        %v1364 = vsub.s32 0, %v1363
        %v1365 = vrot.slane %v1360, %v1364
        %v1368 = vsel %vm674, %v1353, 0
        %1370 = vmatprep.subr.mxu0 0.0
        %1371 = vmatpush1.msra.mxu0 0.0
        %1372 = vmatprep.subr.mxu0 0.0
        %1373 = vmatpush1.msra.mxu0 0.0
        %1374 = vmatprep.subr.mxu0 0.0
        %1375 = vmatpush1.msra.mxu0 0.0
        %1376 = vmatprep.subr.mxu0 0.0
        %1377 = vmatpush1.msra.mxu0 0.0
        %1378 = vmatprep.subr.mxu0 0.0
        %1379 = vmatpush1.msra.mxu0 0.0
        %1380 = vmatprep.subr.mxu0 0.0
        %1381 = vmatpush1.msra.mxu0 0.0
        %1382 = vmatprep.subr.mxu0 0.0
        %1383 = vmatpush1.msra.mxu0 0.0
        %1384 = vmatprep.subr.mxu0 0.0
        %1385 = vmatpush1.msra.mxu0 0.0
        %1386 = vmatprep.subr.mxu0 0.0
        %1387 = vmatpush1.msra.mxu0 0.0
        %1388 = vmatprep.subr.mxu0 0.0
        %1389 = vmatpush1.msra.mxu0 0.0
        %1390 = vmatprep.subr.mxu0 0.0
        %1391 = vmatpush1.msra.mxu0 0.0
        %1392 = vmatprep.subr.mxu0 0.0
        %1393 = vmatpush1.msra.mxu0 0.0
        %1394 = vmatprep.subr.mxu0 0.0
        %1395 = vmatpush1.msra.mxu0 %v1358
        %1396 = vmatprep.subr.mxu0 0.0
        %1397 = vmatpush1.msra.mxu0 %v1357
        %1398 = vmatprep.subr.mxu0 0.0
        %1399 = vmatpush1.msra.mxu0 %v1356
        %1400 = vmatprep.subr.mxu0 0.0
        %1401 = vmatpush1.msra.mxu0 %v1355
        %1402 = vmatprep.subr.mxu0 0.0
        %1403 = vmatpush2.msra.mxu0 0.0
        %1404 = vmatprep.subr.mxu0 0.0
        %1405 = vmatpush2.msra.mxu0 0.0
        %1406 = vmatprep.subr.mxu0 0.0
        %1407 = vmatpush2.msra.mxu0 0.0
        %1408 = vmatprep.subr.mxu0 0.0
        %1409 = vmatpush2.msra.mxu0 0.0
        %1410 = vmatprep.subr.mxu0 0.0
        %1411 = vmatpush2.msra.mxu0 0.0
        %1412 = vmatprep.subr.mxu0 0.0
        %1413 = vmatpush2.msra.mxu0 0.0
        %1414 = vmatprep.subr.mxu0 0.0
        %1415 = vmatpush2.msra.mxu0 0.0
        %1416 = vmatprep.subr.mxu0 0.0
        %1417 = vmatpush2.msra.mxu0 0.0
        %1418 = vmatprep.subr.mxu0 0.0
        %1419 = vmatpush2.msra.mxu0 0.0
        %1420 = vmatprep.subr.mxu0 0.0
        %1421 = vmatpush2.msra.mxu0 0.0
        %1422 = vmatprep.subr.mxu0 0.0
        %1423 = vmatpush2.msra.mxu0 0.0
        %1424 = vmatprep.subr.mxu0 0.0
        %1425 = vmatpush2.msra.mxu0 0.0
        %1426 = vmatprep.subr.mxu0 0.0
        %1427 = vmatpush2.msra.mxu0 0.0
        %1428 = vmatprep.subr.mxu0 0.0
        %1429 = vmatpush2.msra.mxu0 0.0
        %1430 = vmatprep.subr.mxu0 0.0
        %1431 = vmatpush2.msra.mxu0 0.0
        %1432 = vmatprep.subr.mxu0 0.0
        %1433 = vmatpush2.msra.mxu0 0.0
        %1434 = vmatprep.mubr.f32.mxu0 0.0
        %1435 = vmatmul.mubr.f32.gmra.mxu0 %v1368
        %v1436 = vpop.f32.mrf.mxu0
        %v1437 = vadd.f32 %v1365, %v1436
        %v1438 = vpop.f32.mrf.mxu0
        %1439 = vdwg.mxu0
        %s1440 = scalar_lea.vmem [#allocation14], 2
        %v1441 = vld [vmem:[%s1440] sm:$0x1]
        %s1442 = scalar_lea.vmem [#allocation16], 2
        %v1443 = vld [vmem:[%s1442] sm:$0x1]
        %v1444 = vsel %vm674, %v1437, 0.0
        %1445 = vadd.xlane.f32.xlu0 %v1444
        %v1446 = vpop.xlane.xlu0 %1445
        %v1447 = vmul.f32 %v1446, %v810
        %v1448 = vsub.f32 %v1437, %v1447
        %v1449 = vmul.f32 %v1448, %v1448
        %v1450 = vsel %vm674, %v1449, 0.0
        %1451 = vadd.xlane.f32.xlu0 %v1450
        %v1452 = vpop.xlane.xlu0 %1451
        %v1453 = vmul.f32 %v1452, %v810
        %v1454 = vadd.f32 %v1453, 1e-05
        %v1455 = vrsqrt.pop %v1454
        %v1456 = vmul.f32 %v1448, %v1455
        %v1458 = vlaneseq
        %v1459 = vshrl.u32 %v1458, 7
        %v1460 = vsub.s32 0, %v1459
        %v1461 = vrot.slane %v1441, %v1460
        %v1463 = vmul.f32 %v1456, %v1461
        %v1465 = vlaneseq
        %v1466 = vshrl.u32 %v1465, 7
        %v1467 = vsub.s32 0, %v1466
        %v1468 = vrot.slane %v1443, %v1467
        %v1470 = vadd.f32 %v1463, %v1468
        %v1471 = vmul.f32 %v1470, 0.5
        %v1472 = vmul.f32 %v1470, 0.70710677
        %vm1473 = vcmp.ge.f32.partialorder %v1472, 0.0
        %v1474 = vsel %vm1473, 1.0, -1.0
        %v1475 = vand.u32 2147483647, %v1472
        %v1476 = vmul.f32 %v1475, 0.3275911
        %v1477 = vadd.f32 %v1476, 1.0
        %v1478 = vrcp.pop %v1477
        %v1479 = vmul.f32 1.0, %v1478
        %v1480 = vmul.f32 %v1479, 1.0614054
        %v1481 = vsub.f32 %v1480, 1.4531521
        %v1482 = vmul.f32 %v1481, %v1479
        %v1483 = vadd.f32 %v1482, 1.4214138
        %v1484 = vmul.f32 %v1483, %v1479
        %v1485 = vsub.f32 %v1484, 0.28449672
        %v1486 = vmul.f32 %v1485, %v1479
        %v1487 = vadd.f32 %v1486, 0.2548296
        %v1488 = vmul.f32 %v1487, %v1479
        %v1489 = vsub.f32 0.0, %v1475
        %v1490 = vmul.f32 %v1489, %v1475
        %v1491 = vmul.f32 %v1490, 1.442695
        %v1492 = vpow.pop %v1491
        %v1493 = vmul.f32 %v1488, %v1492
        %v1494 = vsub.f32 1.0, %v1493
        %v1495 = vmul.f32 %v1474, %v1494
        %v1496 = vadd.f32 %v1495, 1.0
        %v1497 = vmul.f32 %v1471, %v1496
        %v1498 = vadd.f32 %v1250, %v1497
        %v1499 = vmul.f32 %v1498, %v761
        %v1500 = vld [vmem:[%s13] sm:$0xff]
        %v1501 = vld [vmem:[%s13 + $0x8] sm:$0xff]
        %v1502 = vld [vmem:[%s13 + $0x10] sm:$0xff]
        %v1503 = vld [vmem:[%s13 + $0x18] sm:$0xff]
        %v1504 = vld [vmem:[%s14] sm:$0x1]
        %v1506 = vlaneseq
        %v1507 = vshrl.u32 %v1506, 7
        %v1508 = vsub.s32 0, %v1507
        %v1509 = vrot.slane %v1504, %v1508
        %v1512 = vsel %vm674, %v1499, 0
        %1514 = vmatprep.subr.mxu0 0.0
        %1515 = vmatpush1.msra.mxu0 0.0
        %1516 = vmatprep.subr.mxu0 0.0
        %1517 = vmatpush1.msra.mxu0 0.0
        %1518 = vmatprep.subr.mxu0 0.0
        %1519 = vmatpush1.msra.mxu0 0.0
        %1520 = vmatprep.subr.mxu0 0.0
        %1521 = vmatpush1.msra.mxu0 0.0
        %1522 = vmatprep.subr.mxu0 0.0
        %1523 = vmatpush1.msra.mxu0 0.0
        %1524 = vmatprep.subr.mxu0 0.0
        %1525 = vmatpush1.msra.mxu0 0.0
        %1526 = vmatprep.subr.mxu0 0.0
        %1527 = vmatpush1.msra.mxu0 0.0
        %1528 = vmatprep.subr.mxu0 0.0
        %1529 = vmatpush1.msra.mxu0 0.0
        %1530 = vmatprep.subr.mxu0 0.0
        %1531 = vmatpush1.msra.mxu0 0.0
        %1532 = vmatprep.subr.mxu0 0.0
        %1533 = vmatpush1.msra.mxu0 0.0
        %1534 = vmatprep.subr.mxu0 0.0
        %1535 = vmatpush1.msra.mxu0 0.0
        %1536 = vmatprep.subr.mxu0 0.0
        %1537 = vmatpush1.msra.mxu0 0.0
        %1538 = vmatprep.subr.mxu0 0.0
        %1539 = vmatpush1.msra.mxu0 %v1503
        %1540 = vmatprep.subr.mxu0 0.0
        %1541 = vmatpush1.msra.mxu0 %v1502
        %1542 = vmatprep.subr.mxu0 0.0
        %1543 = vmatpush1.msra.mxu0 %v1501
        %1544 = vmatprep.subr.mxu0 0.0
        %1545 = vmatpush1.msra.mxu0 %v1500
        %1546 = vmatprep.subr.mxu0 0.0
        %1547 = vmatpush2.msra.mxu0 0.0
        %1548 = vmatprep.subr.mxu0 0.0
        %1549 = vmatpush2.msra.mxu0 0.0
        %1550 = vmatprep.subr.mxu0 0.0
        %1551 = vmatpush2.msra.mxu0 0.0
        %1552 = vmatprep.subr.mxu0 0.0
        %1553 = vmatpush2.msra.mxu0 0.0
        %1554 = vmatprep.subr.mxu0 0.0
        %1555 = vmatpush2.msra.mxu0 0.0
        %1556 = vmatprep.subr.mxu0 0.0
        %1557 = vmatpush2.msra.mxu0 0.0
        %1558 = vmatprep.subr.mxu0 0.0
        %1559 = vmatpush2.msra.mxu0 0.0
        %1560 = vmatprep.subr.mxu0 0.0
        %1561 = vmatpush2.msra.mxu0 0.0
        %1562 = vmatprep.subr.mxu0 0.0
        %1563 = vmatpush2.msra.mxu0 0.0
        %1564 = vmatprep.subr.mxu0 0.0
        %1565 = vmatpush2.msra.mxu0 0.0
        %1566 = vmatprep.subr.mxu0 0.0
        %1567 = vmatpush2.msra.mxu0 0.0
        %1568 = vmatprep.subr.mxu0 0.0
        %1569 = vmatpush2.msra.mxu0 0.0
        %1570 = vmatprep.subr.mxu0 0.0
        %1571 = vmatpush2.msra.mxu0 0.0
        %1572 = vmatprep.subr.mxu0 0.0
        %1573 = vmatpush2.msra.mxu0 0.0
        %1574 = vmatprep.subr.mxu0 0.0
        %1575 = vmatpush2.msra.mxu0 0.0
        %1576 = vmatprep.subr.mxu0 0.0
        %1577 = vmatpush2.msra.mxu0 0.0
        %1578 = vmatprep.mubr.f32.mxu0 0.0
        %1579 = vmatmul.mubr.f32.gmra.mxu0 %v1512
        %v1580 = vpop.f32.mrf.mxu0
        %v1581 = vadd.f32 %v1509, %v1580
        %v1582 = vpop.f32.mrf.mxu0
        %1583 = vdwg.mxu0
        %v1584 = vmul.f32 %v1581, %v761
        %1585 = vst.msk [vmem:[%s655] sm:$0xff] %vm674, %v1584
        %s1586 = sand.u32 %s376, 1
        %s1587 = scalar_lea.sflag [#allocation4], %s1586
        %s1588 = sand.u32 %s376, 1
        %s1589 = smul.addr %s1588, 8
        %s1590 = scalar_lea.vmem [#allocation17], %s1589
        // Predicated region
        $region117: #{tpu_custom_call.1} parent=79 // pred_check
          %p1591 = pneg %p386
        $region118: #{tpu_custom_call.1} parent=79 // pred_check_branch
          %1593 = sbr.rel (%p1591) target = $region120
        $region119: #{tpu_custom_call.1} parent=79 // pred_region
          %s1595 = ssub.s32 128, 128
          %1596 = vsyncadd %s1587, %s1595
          %s1597 = smul.addr %s38, 128
          %s1598 = scalar_lea.hbm %s15, %s1597
          %s1600 = sshll.u32 %s1590, 4
          %s1601 = int_to_ptr.vmem [resolvable:$true] %s1600
          %1603 = dma.vmem_to_hbm [thread:$0]  %s1601, 128, %s1598, %s1587
        $region120: #{tpu_custom_call.1} parent=79 // pred_fallthru
          _
      $region80: #{tpu_custom_call.1} parent=5 // pred_fallthru
        _
      %p1604 = scmp.le.s32.totalorder 2, %s33
      // Predicated region
      $region121: #{tpu_custom_call.1} parent=5 // pred_check
        %p1605 = pneg %p1604
      $region122: #{tpu_custom_call.1} parent=5 // pred_check_branch
        %1607 = sbr.rel (%p1605) target = $region124
      $region123: #{tpu_custom_call.1} parent=5 // pred_region
        %s1608 = ssub.s32 %s33, 2
        // Predicated region
        $region125: #{tpu_custom_call.1} parent=123 // pred_check
          %p1609 = pneg %p392
        $region126: #{tpu_custom_call.1} parent=123 // pred_check_branch
          %1611 = sbr.rel (%p1609) target = $region128
        $region127: #{tpu_custom_call.1} parent=123 // pred_region
          %s1612 = sand.u32 %s377, 1
          %s1613 = scalar_lea.sflag [#allocation4], %s1612
          %s1614 = sand.u32 %s377, 1
          %s1615 = smul.addr %s1614, 8
          %s1616 = scalar_lea.vmem [#allocation17], %s1615
          %1617 = dma.done %s1613, 128
        $region128: #{tpu_custom_call.1} parent=123 // pred_fallthru
          _
      $region124: #{tpu_custom_call.1} parent=5 // pred_fallthru
        _
    $region6: #{tpu_custom_call.1} parent=1 // loop_footer
      %s37 = sadd.s32 1, %s33
    $region7: #{tpu_custom_call.1} parent=1 // loop_footer_branch
      %32 = sbr.rel target = $region3
    $region8: #{tpu_custom_call.1} parent=1 // loop_exit
      _
    %1618 = vsyncpa [#allocation3], 1
    %s1619 = scalar_lea.sflag [#allocation3], 1
    %1620 = vsyncpa %s1619, 1
    %1621 = vsyncpa [#allocation6], 1
    %s1622 = scalar_lea.sflag [#allocation6], 1
    %1623 = vsyncpa %s1622, 1
    %1624 = vsyncpa [#allocation9], 1
    %1625 = vsyncpa [#allocation12], 1
    %1626 = vsyncpa [#allocation15], 1
    %1627 = vsyncpa [#allocation4], 1
    %s1628 = scalar_lea.sflag [#allocation4], 1
    %1629 = vsyncpa %s1628, 1

</llo_original>
